<compile_context>
chip_gen: v7x
topology: tpu7x:2x2x1
jax: 0.10.0
libtpu: 0.0.40
codegen_flags: <defaults>
</compile_context>

<pallas_src>
import functools

import jax
import jax.numpy as jnp
from jax import lax
from jax.experimental import pallas as pl
from jax.experimental.pallas import tpu as pltpu


def _cdiv(a, b):
    return -(-a // b)


def _vmem_limit_bytes():
    """Generation-aware VMEM request (v5e/v6e: 128 MiB, v7x: 64 MiB)."""
    cap = 64 * 1024 * 1024
    try:
        info = pltpu.get_tpu_info()
        cap = getattr(info, "vmem_capacity_bytes", None) or cap
    except Exception:
        pass
    # Leave ~30% headroom for compiler-internal scratch / double buffering.
    return min(int(cap * 0.7), 100 * 1024 * 1024)


def _choose_key_tiling(L, E, itemsize, vmem_limit, key_tile=None):
    """Pick the key tile TK and the padded key length (multiple of TK)."""
    if key_tile is not None:
        tk = int(key_tile)
    elif L <= 512:
        tk = L                        # single tile; full-dim blocks are legal
    else:
        # ~1-2 MiB of k per tile amortizes per-step pipeline overhead while
        # the double-buffered k tiles + score tiles + weights stay well under
        # the VMEM budget.
        budget = max(128 * E * itemsize,
                     min(2 * 1024 * 1024, vmem_limit // 8))
        tk = max(128, (budget // (E * itemsize)) // 128 * 128)
        tk = min(tk, _cdiv(L, 128) * 128)
        # Rebalance so padding waste is < 128 keys.
        nkt = _cdiv(L, tk)
        tk = _cdiv(_cdiv(L, nkt), 128) * 128
    l_pad = _cdiv(L, tk) * tk
    return tk, l_pad


def _noq_attn_kernel(a_ref, c_ref, k_ref, wkt_ref, bk_ref,           # inputs
                     out_ref, score_ref, m_out_ref, l_out_ref,       # outputs
                     m_scr, l_scr, acc_scr,                          # scratch
                     *, n_head, q_len, hidden_dim, true_klen, key_tile):
    """One (batch, key-tile) grid step, all heads fused.

    a_ref    : (HQ, E)         folded query  A[h*q_len+q] = qx_h[q] @ Wk_h
    c_ref    : (HQ, 1)         folded bias   c[h*q_len+q] = qx_h[q] . bk_h
    k_ref    : (1, TK, E)      key tile (compute dtype, read once per tile)
    wkt_ref  : (E, H*hd)       Wk^T, head-major columns
    bk_ref   : (1, H*hd)       key bias (f32)
    out_ref  : (1, q_len, H*hd)  attention output   (written at last key tile)
    score_ref: (1, HQ, TK)     raw (pre-softmax) scores for this key tile
    m/l_out  : (1, HQ, 1)      final online-softmax stats (written at last tile)
    m/l/acc  : online-softmax running max / denom / weighted sum (f32)
    """
    t = pl.program_id(1)
    nkt = pl.num_programs(1)

    @pl.when(t == 0)
    def _init():
        m_scr[...] = jnp.full_like(m_scr, -jnp.inf)
        l_scr[...] = jnp.zeros_like(l_scr)
        acc_scr[...] = jnp.zeros_like(acc_scr)

    k_tile = k_ref[0]                                  # (TK, E)
    mm_dt = k_tile.dtype

    # Scores for ALL heads, straight from k (no dependency on kx):
    #   s = (qx @ Wk) @ k^T + qx . bk   -- contraction on the last dims, so no
    # explicit transpose of k is materialized.
    s = lax.dot_general(a_ref[...].astype(mm_dt), k_tile,
                        (((1,), (1,)), ((), ())),
                        preferred_element_type=jnp.float32)          # (HQ, TK)
    s = s + c_ref[...].astype(jnp.float32)

    # Mask padded key positions (only when the key length was padded).
    if true_klen % key_tile != 0:
        col = t * key_tile + lax.broadcasted_iota(jnp.int32, s.shape, 1)
        s = jnp.where(col < true_klen, s, -jnp.inf)

    # Fused key/value projection for ALL heads (wide MXU pass, f32 accumulate).
    kx = jnp.dot(k_tile, wkt_ref[...],
                 preferred_element_type=jnp.float32)                 # (TK, H*hd)
    kx = (kx + bk_ref[...].astype(jnp.float32)).astype(mm_dt)

    # Online softmax across key tiles (all f32 math).
    m_prev = m_scr[...]
    m_new = jnp.maximum(m_prev, jnp.max(s, axis=-1, keepdims=True))
    alpha = jnp.exp(m_prev - m_new)
    p = jnp.exp(s - m_new)                                           # (HQ, TK)

    l_scr[...] = alpha * l_scr[...] + jnp.sum(p, axis=-1, keepdims=True)
    # (HQ, H*hd) cross-product; the per-head diagonal blocks are extracted at
    # finalize (H is small, so the extra columns are negligible MXU work).
    acc_scr[...] = alpha * acc_scr[...] + jnp.dot(
        p.astype(mm_dt), kx, preferred_element_type=jnp.float32)
    m_scr[...] = m_new

    # Raw scores out, lane-dense (TK is a multiple of 128 for multi-tile runs).
    score_ref[0] = s.astype(score_ref.dtype)

    @pl.when(t == nkt - 1)
    def _finalize():
        m_out_ref[0] = m_scr[...]
        l_out_ref[0] = l_scr[...]
        # Normalize AFTER the (p @ kx) matmul, on the small accumulator.
        norm = acc_scr[...] * (1.0 / l_scr[...])                     # (HQ, H*hd)
        hd = hidden_dim
        blocks = [norm[h * q_len:(h + 1) * q_len, h * hd:(h + 1) * hd]
                  for h in range(n_head)]
        out = blocks[0] if n_head == 1 else jnp.concatenate(blocks, axis=-1)
        out_ref[0] = out.astype(out_ref.dtype)                       # (q_len, H*hd)


def no_query_attention(k, q_param, wq, bq, wk, bk, *, n_head=1,
                       score_fn="dot_product", bilinear_weight=None,
                       key_tile=None, compute_dtype=None,
                       score_dtype=jnp.float32):
    """Forward pass of NoQueryAttention (dropout = 0 is the identity).

    k        : (B, L, E)            key/value sequence
    q_param  : (q_len, E)           learned query parameter (self.q)
    wq, bq   : (H*hd, E), (H*hd,)   w_q nn.Linear weight / bias
    wk, bk   : (H*hd, E), (H*hd,)   w_k nn.Linear weight / bias
    Returns (output (B, q_len, H*hd), score (H*B, q_len, L)) like the module.
    """
    B, L, E = k.shape
    H = n_head
    hd = wk.shape[0] // H
    q_len = q_param.shape[0]
    HQ = H * q_len
    out_dtype = k.dtype

    # ---- tiny input-independent precompute (O(q_len * E * hd)) -------------
    qx = (jnp.dot(q_param, wq.T) + bq).reshape(q_len, H, hd).transpose(1, 0, 2)
    if score_fn == "scaled_dot_product":
        qx = qx / jnp.sqrt(jnp.float32(hd))
    elif score_fn == "bi_linear":
        qx = jnp.einsum("hqd,de->hqe", qx, bilinear_weight)
    elif score_fn != "dot_product":
        # TODO(synk): 'mlp' score (tanh over concatenated features) has no
        # clean single-matmul form; not implemented.
        raise NotImplementedError(f"score_fn={score_fn!r} not supported")

    wk_heads = wk.reshape(H, hd, E)
    bk_heads = bk.reshape(H, hd)
    # Fold the query through the key projection:  s = A @ k^T + c.
    a_mat = jnp.einsum("hqd,hde->hqe", qx, wk_heads).reshape(HQ, E)
    c_vec = jnp.einsum("hqd,hd->hq", qx, bk_heads).reshape(HQ, 1)
    wk_t = wk.T                                   # (E, H*hd), head-major cols
    bk_row = bk.reshape(1, H * hd).astype(jnp.float32)

    # ---- HBM-boundary dtype: bf16 halves the dominant k stream -------------
    cd = jnp.dtype(compute_dtype) if compute_dtype is not None else jnp.dtype(k.dtype)
    k_in = k.astype(cd)
    a_mat = a_mat.astype(cd)
    wk_t = wk_t.astype(cd)

    vmem_limit = _vmem_limit_bytes()
    TK, L_pad = _choose_key_tiling(L, E, cd.itemsize, vmem_limit, key_tile)
    if L_pad != L:
        k_in = jnp.pad(k_in, ((0, 0), (0, L_pad - L), (0, 0)))
    NKT = L_pad // TK

    kernel = functools.partial(_noq_attn_kernel, n_head=H, q_len=q_len,
                               hidden_dim=hd, true_klen=L, key_tile=TK)

    out, score_raw, m_out, l_out = pl.pallas_call(
        kernel,
        out_shape=(
            jax.ShapeDtypeStruct((B, q_len, H * hd), out_dtype),
            jax.ShapeDtypeStruct((B, HQ, L_pad), score_dtype),
            jax.ShapeDtypeStruct((B, HQ, 1), jnp.float32),
            jax.ShapeDtypeStruct((B, HQ, 1), jnp.float32),
        ),
        grid_spec=pltpu.PrefetchScalarGridSpec(
            num_scalar_prefetch=0,
            grid=(B, NKT),
            in_specs=[
                pl.BlockSpec((HQ, E), lambda b, t: (0, 0)),          # A (folded q)
                pl.BlockSpec((HQ, 1), lambda b, t: (0, 0)),          # c (folded bias)
                pl.BlockSpec((1, TK, E), lambda b, t: (b, t, 0)),    # k tile
                pl.BlockSpec((E, H * hd), lambda b, t: (0, 0)),      # Wk^T
                pl.BlockSpec((1, H * hd), lambda b, t: (0, 0)),      # b_k
            ],
            out_specs=[
                pl.BlockSpec((1, q_len, H * hd), lambda b, t: (b, 0, 0)),
                pl.BlockSpec((1, HQ, TK), lambda b, t: (b, 0, t)),
                pl.BlockSpec((1, HQ, 1), lambda b, t: (b, 0, 0)),
                pl.BlockSpec((1, HQ, 1), lambda b, t: (b, 0, 0)),
            ],
            scratch_shapes=[
                pltpu.VMEM((HQ, 1), jnp.float32),        # running max
                pltpu.VMEM((HQ, 1), jnp.float32),        # running denom
                pltpu.VMEM((HQ, H * hd), jnp.float32),   # running weighted sum
            ],
        ),
        compiler_params=pltpu.CompilerParams(
            dimension_semantics=("parallel", "arbitrary"),
            vmem_limit_bytes=vmem_limit,
        ),
    )(a_mat, c_vec, k_in, wk_t, bk_row)

    # Softmax over the full key axis from the kernel's running (m, l) stats:
    # a single elementwise pass instead of jax.nn.softmax's 3 passes.
    logits = score_raw[:, :, :L].astype(jnp.float32)
    score = jnp.exp(logits - m_out) / l_out                          # (B, HQ, L)
    # torch ordering: heads stacked along the batch dim (head-major).
    score = score.reshape(B, H, q_len, L).transpose(1, 0, 2, 3)
    score = score.reshape(H * B, q_len, L)
    # Output is already (B, q_len, H*hd) = torch's cat(split(out, B, 0), -1).
    return out, score


def _reference(k, q_param, wq, bq, wk, bk, n_head):
    """Pure-JAX replica of NoQueryAttention.forward (dot_product, dropout=0)."""
    B, L, E = k.shape
    H = n_head
    hd = wk.shape[0] // H
    q_len = q_param.shape[0]
    q = jnp.broadcast_to(q_param[None], (B, q_len, E))
    kx = jnp.einsum("ble,fe->blf", k, wk) + bk
    qx = jnp.einsum("bqe,fe->bqf", q, wq) + bq
    kx = kx.reshape(B, L, H, hd).transpose(2, 0, 1, 3).reshape(H * B, L, hd)
    qx = qx.reshape(B, q_len, H, hd).transpose(2, 0, 1, 3).reshape(H * B, q_len, hd)
    score = jnp.einsum("bqd,bkd->bqk", qx, kx)
    score = jax.nn.softmax(score, axis=-1)
    output = jnp.einsum("bqk,bkd->bqd", score, kx)
    output = jnp.concatenate(jnp.split(output, H, axis=0), axis=-1)
    return output, score


def _make_params(key, embed_dim, n_head, q_len):
    hd = embed_dim // n_head
    kq, kwq, kbq, kwk, kbk = jax.random.split(key, 5)
    sd = 1.0 / jnp.sqrt(jnp.float32(embed_dim))
    u = lambda kk, shape: jax.random.uniform(kk, shape, minval=-sd, maxval=sd,
                                             dtype=jnp.float32)
    return (u(kq, (q_len, embed_dim)),
            u(kwq, (n_head * hd, embed_dim)), u(kbq, (n_head * hd,)),
            u(kwk, (n_head * hd, embed_dim)), u(kbk, (n_head * hd,)))


def _run_case(key, B, L, E, n_head, q_len, key_tile=None, compute_dtype=None,
              atol=1e-3, rtol=1e-3):
    kk, kp = jax.random.split(key)
    k = jax.random.normal(kk, (B, L, E), dtype=jnp.float32)
    q_param, wq, bq, wk, bk = _make_params(kp, E, n_head, q_len)

    out, score = no_query_attention(k, q_param, wq, bq, wk, bk, n_head=n_head,
                                    key_tile=key_tile,
                                    compute_dtype=compute_dtype)
    out = jax.block_until_ready(out)
    score = jax.block_until_ready(score)

    ref_out, ref_score = _reference(k, q_param, wq, bq, wk, bk, n_head)
    hd = E // n_head
    assert out.shape == (B, q_len, n_head * hd), out.shape
    assert score.shape == (n_head * B, q_len, L), score.shape
    assert jnp.allclose(out, ref_out, atol=atol, rtol=rtol), "output mismatch"
    assert jnp.allclose(score, ref_score, atol=atol, rtol=rtol), "score mismatch"


if __name__ == "__main__":
    # Full-precision f32 matmuls so the kernel matches the pure-JAX reference
    # tightly in the f32 cases (bf16 case is checked with a loose tolerance).
    jax.config.update("jax_default_matmul_precision", "highest")

    key = jax.random.PRNGKey(0)
    k1, k2, k3, k4 = jax.random.split(key, 4)

    # 1) module defaults: embed_dim=32, n_head=1, q_len=1, single key tile.
    _run_case(k1, B=2, L=8, E=32, n_head=1, q_len=1)
    # 2) multi-head fused + multiple key tiles (online softmax across tiles).
    _run_case(k2, B=2, L=384, E=32, n_head=2, q_len=1, key_tile=128)
    # 3) ragged key length (pad + mask) and q_len > 1.
    _run_case(k3, B=2, L=200, E=32, n_head=1, q_len=2, key_tile=128)
    # 4) bf16 HBM-boundary cast (f32 accumulation / softmax), loose tolerance.
    _run_case(k4, B=2, L=256, E=64, n_head=2, q_len=1, key_tile=128,
              compute_dtype=jnp.bfloat16, atol=5e-2, rtol=5e-2)

    print("KERNEL_OK")
</pallas_src>

<mosaic_0001>
module attributes {stable_mosaic.version = 11 : i64} {
  func.func @_noq_attn_kernel(%arg0: i32, %arg1: i32, %arg2: memref<1x32xf32, #tpu.memory_space<vmem>>, %arg3: memref<1x1xf32, #tpu.memory_space<vmem>>, %arg4: memref<1x8x32xf32, #tpu.memory_space<vmem>>, %arg5: memref<32x32xf32, #tpu.memory_space<vmem>>, %arg6: memref<1x32xf32, #tpu.memory_space<vmem>>, %arg7: memref<1x1x32xf32, #tpu.memory_space<vmem>>, %arg8: memref<1x1x8xf32, #tpu.memory_space<vmem>>, %arg9: memref<1x1x1xf32, #tpu.memory_space<vmem>>, %arg10: memref<1x1x1xf32, #tpu.memory_space<vmem>>, %arg11: memref<1x1xf32, #tpu.memory_space<vmem>>, %arg12: memref<1x1xf32, #tpu.memory_space<vmem>>, %arg13: memref<1x32xf32, #tpu.memory_space<vmem>>) attributes {dimension_semantics = [#tpu.dimension_semantics<parallel>, #tpu.dimension_semantics<arbitrary>], iteration_bounds = array<i64: 2, 1>, scalar_prefetch = 0 : i64, scratch_operands = 3 : i64, tpu.core_type = #tpu.core_type<tc>, window_params = [{pipeline_mode = #tpu.pipeline_mode<synchronous>, transform_indices = @transform_0, window_bounds = array<i64: 1, 32>}, {pipeline_mode = #tpu.pipeline_mode<synchronous>, transform_indices = @transform_1, window_bounds = array<i64: 1, 1>}, {transform_indices = @transform_2, window_bounds = array<i64: 1, 8, 32>}, {pipeline_mode = #tpu.pipeline_mode<synchronous>, transform_indices = @transform_3, window_bounds = array<i64: 32, 32>}, {pipeline_mode = #tpu.pipeline_mode<synchronous>, transform_indices = @transform_4, window_bounds = array<i64: 1, 32>}, {transform_indices = @transform_5, window_bounds = array<i64: 1, 1, 32>}, {transform_indices = @transform_6, window_bounds = array<i64: 1, 1, 8>}, {transform_indices = @transform_7, window_bounds = array<i64: 1, 1, 1>}, {transform_indices = @transform_8, window_bounds = array<i64: 1, 1, 1>}]} {
    %c0_i32 = arith.constant 0 : i32
    %0 = arith.cmpi eq, %arg1, %c0_i32 : i32
    %1 = arith.extui %0 : i1 to i32
    %c0_i32_0 = arith.constant 0 : i32
    %2 = arith.cmpi ne, %1, %c0_i32_0 : i32
    scf.if %2 {
      %cst_32 = arith.constant 0xFF800000 : f32
      %43 = vector.broadcast %cst_32 : f32 to vector<1x1xf32>
      %c0_33 = arith.constant 0 : index
      %c0_34 = arith.constant 0 : index
      %44 = vector.load %arg11[%c0_33, %c0_34] : memref<1x1xf32, #tpu.memory_space<vmem>>, vector<1x1xf32>
      tpu.vector_store %arg11[%c0_33, %c0_34], %43 {strides = array<i32>} : memref<1x1xf32, #tpu.memory_space<vmem>>, vector<1x1xf32>,
      %cst_35 = arith.constant 0.000000e+00 : f32
      %45 = vector.broadcast %cst_35 : f32 to vector<1x1xf32>
      %c0_36 = arith.constant 0 : index
      %c0_37 = arith.constant 0 : index
      %46 = vector.load %arg12[%c0_36, %c0_37] : memref<1x1xf32, #tpu.memory_space<vmem>>, vector<1x1xf32>
      tpu.vector_store %arg12[%c0_36, %c0_37], %45 {strides = array<i32>} : memref<1x1xf32, #tpu.memory_space<vmem>>, vector<1x1xf32>,
      %cst_38 = arith.constant 0.000000e+00 : f32
      %47 = vector.broadcast %cst_38 : f32 to vector<1x32xf32>
      %c0_39 = arith.constant 0 : index
      %c0_40 = arith.constant 0 : index
      %48 = vector.load %arg13[%c0_39, %c0_40] : memref<1x32xf32, #tpu.memory_space<vmem>>, vector<1x32xf32>
      tpu.vector_store %arg13[%c0_39, %c0_40], %47 {strides = array<i32>} : memref<1x32xf32, #tpu.memory_space<vmem>>, vector<1x32xf32>,
    } else {
    }
    %c0 = arith.constant 0 : index
    %c0_1 = arith.constant 0 : index
    %c0_2 = arith.constant 0 : index
    %3 = vector.load %arg4[%c0, %c0_1, %c0_2] : memref<1x8x32xf32, #tpu.memory_space<vmem>>, vector<1x8x32xf32>
    %4 = vector.shape_cast %3 : vector<1x8x32xf32> to vector<8x32xf32>
    %c0_3 = arith.constant 0 : index
    %c0_4 = arith.constant 0 : index
    %5 = vector.load %arg2[%c0_3, %c0_4] : memref<1x32xf32, #tpu.memory_space<vmem>>, vector<1x32xf32>
    %cst = arith.constant dense<0.000000e+00> : vector<1x8xf32>
    %6 = tpu.matmul %5, %4, %cst {dimension_numbers = #tpu.dot_dimension_numbers<[1], [1], [0], [0], [0, 0, 1, 0], [], []>, precision = #tpu.contract_precision<fp32>} : vector<1x32xf32>, vector<8x32xf32>, vector<1x8xf32> -> vector<1x8xf32>
    %c0_5 = arith.constant 0 : index
    %c0_6 = arith.constant 0 : index
    %7 = vector.load %arg3[%c0_5, %c0_6] : memref<1x1xf32, #tpu.memory_space<vmem>>, vector<1x1xf32>
    %8 = vector.broadcast %7 : vector<1x1xf32> to vector<1x8xf32>
    %9 = arith.addf %6, %8 : vector<1x8xf32>
    %c0_7 = arith.constant 0 : index
    %c0_8 = arith.constant 0 : index
    %10 = vector.load %arg5[%c0_7, %c0_8] : memref<32x32xf32, #tpu.memory_space<vmem>>, vector<32x32xf32>
    %cst_9 = arith.constant dense<0.000000e+00> : vector<8x32xf32>
    %11 = tpu.matmul %4, %10, %cst_9 {dimension_numbers = #tpu.dot_dimension_numbers<[1], [0], [0], [1], [0, 0, 1, 1], [], []>, precision = #tpu.contract_precision<fp32>} : vector<8x32xf32>, vector<32x32xf32>, vector<8x32xf32> -> vector<8x32xf32>
    %c0_10 = arith.constant 0 : index
    %c0_11 = arith.constant 0 : index
    %12 = vector.load %arg6[%c0_10, %c0_11] : memref<1x32xf32, #tpu.memory_space<vmem>>, vector<1x32xf32>
    %13 = vector.broadcast %12 : vector<1x32xf32> to vector<8x32xf32>
    %14 = arith.addf %11, %13 : vector<8x32xf32>
    %c0_12 = arith.constant 0 : index
    %c0_13 = arith.constant 0 : index
    %15 = vector.load %arg11[%c0_12, %c0_13] : memref<1x1xf32, #tpu.memory_space<vmem>>, vector<1x1xf32>
    %cst_14 = arith.constant dense<0xFF800000> : vector<1xf32>
    %16 = vector.multi_reduction <maximumf>, %9, %cst_14 [1] : vector<1x8xf32> to vector<1xf32>
    %17 = vector.shape_cast %16 : vector<1xf32> to vector<1x1xf32>
    %18 = arith.maximumf %15, %17 : vector<1x1xf32>
    %19 = arith.subf %15, %18 : vector<1x1xf32>
    %20 = math.exp %19 : vector<1x1xf32>
    %21 = vector.broadcast %18 : vector<1x1xf32> to vector<1x8xf32>
    %22 = arith.subf %9, %21 : vector<1x8xf32>
    %23 = math.exp %22 : vector<1x8xf32>
    %c0_15 = arith.constant 0 : index
    %c0_16 = arith.constant 0 : index
    %24 = vector.load %arg12[%c0_15, %c0_16] : memref<1x1xf32, #tpu.memory_space<vmem>>, vector<1x1xf32>
    %25 = arith.mulf %20, %24 : vector<1x1xf32>
    %cst_17 = arith.constant dense<0.000000e+00> : vector<1xf32>
    %26 = vector.multi_reduction <add>, %23, %cst_17 [1] : vector<1x8xf32> to vector<1xf32>
    %27 = vector.shape_cast %26 : vector<1xf32> to vector<1x1xf32>
    %28 = arith.addf %25, %27 : vector<1x1xf32>
    %c0_18 = arith.constant 0 : index
    %c0_19 = arith.constant 0 : index
    %29 = vector.load %arg12[%c0_18, %c0_19] : memref<1x1xf32, #tpu.memory_space<vmem>>, vector<1x1xf32>
    tpu.vector_store %arg12[%c0_18, %c0_19], %28 {strides = array<i32>} : memref<1x1xf32, #tpu.memory_space<vmem>>, vector<1x1xf32>,
    %c0_20 = arith.constant 0 : index
    %c0_21 = arith.constant 0 : index
    %30 = vector.load %arg13[%c0_20, %c0_21] : memref<1x32xf32, #tpu.memory_space<vmem>>, vector<1x32xf32>
    %31 = vector.broadcast %20 : vector<1x1xf32> to vector<1x32xf32>
    %32 = arith.mulf %31, %30 : vector<1x32xf32>
    %cst_22 = arith.constant dense<0.000000e+00> : vector<1x32xf32>
    %33 = tpu.matmul %23, %14, %cst_22 {dimension_numbers = #tpu.dot_dimension_numbers<[1], [0], [0], [1], [0, 0, 1, 1], [], []>, precision = #tpu.contract_precision<fp32>} : vector<1x8xf32>, vector<8x32xf32>, vector<1x32xf32> -> vector<1x32xf32>
    %34 = arith.addf %32, %33 : vector<1x32xf32>
    %c0_23 = arith.constant 0 : index
    %c0_24 = arith.constant 0 : index
    %35 = vector.load %arg13[%c0_23, %c0_24] : memref<1x32xf32, #tpu.memory_space<vmem>>, vector<1x32xf32>
    tpu.vector_store %arg13[%c0_23, %c0_24], %34 {strides = array<i32>} : memref<1x32xf32, #tpu.memory_space<vmem>>, vector<1x32xf32>,
    %c0_25 = arith.constant 0 : index
    %c0_26 = arith.constant 0 : index
    %36 = vector.load %arg11[%c0_25, %c0_26] : memref<1x1xf32, #tpu.memory_space<vmem>>, vector<1x1xf32>
    tpu.vector_store %arg11[%c0_25, %c0_26], %18 {strides = array<i32>} : memref<1x1xf32, #tpu.memory_space<vmem>>, vector<1x1xf32>,
    %c0_27 = arith.constant 0 : index
    %c0_28 = arith.constant 0 : index
    %c0_29 = arith.constant 0 : index
    %37 = vector.load %arg8[%c0_27, %c0_28, %c0_29] : memref<1x1x8xf32, #tpu.memory_space<vmem>>, vector<1x1x8xf32>
    %38 = vector.shape_cast %37 : vector<1x1x8xf32> to vector<1x8xf32>
    %39 = vector.shape_cast %9 : vector<1x8xf32> to vector<1x1x8xf32>
    tpu.vector_store %arg8[%c0_27, %c0_28, %c0_29], %39 {strides = array<i32>} : memref<1x1x8xf32, #tpu.memory_space<vmem>>, vector<1x1x8xf32>,
    %c0_i32_30 = arith.constant 0 : i32
    %40 = arith.cmpi eq, %arg1, %c0_i32_30 : i32
    %41 = arith.extui %40 : i1 to i32
    %c0_i32_31 = arith.constant 0 : i32
    %42 = arith.cmpi ne, %41, %c0_i32_31 : i32
    scf.if %42 {
      %c0_32 = arith.constant 0 : index
      %c0_33 = arith.constant 0 : index
      %43 = vector.load %arg11[%c0_32, %c0_33] : memref<1x1xf32, #tpu.memory_space<vmem>>, vector<1x1xf32>
      %c0_34 = arith.constant 0 : index
      %c0_35 = arith.constant 0 : index
      %c0_36 = arith.constant 0 : index
      %44 = vector.load %arg9[%c0_34, %c0_35, %c0_36] : memref<1x1x1xf32, #tpu.memory_space<vmem>>, vector<1x1x1xf32>
      %45 = vector.shape_cast %44 : vector<1x1x1xf32> to vector<1x1xf32>
      %46 = vector.shape_cast %43 : vector<1x1xf32> to vector<1x1x1xf32>
      tpu.vector_store %arg9[%c0_34, %c0_35, %c0_36], %46 {strides = array<i32>} : memref<1x1x1xf32, #tpu.memory_space<vmem>>, vector<1x1x1xf32>,
      %c0_37 = arith.constant 0 : index
      %c0_38 = arith.constant 0 : index
      %47 = vector.load %arg12[%c0_37, %c0_38] : memref<1x1xf32, #tpu.memory_space<vmem>>, vector<1x1xf32>
      %c0_39 = arith.constant 0 : index
      %c0_40 = arith.constant 0 : index
      %c0_41 = arith.constant 0 : index
      %48 = vector.load %arg10[%c0_39, %c0_40, %c0_41] : memref<1x1x1xf32, #tpu.memory_space<vmem>>, vector<1x1x1xf32>
      %49 = vector.shape_cast %48 : vector<1x1x1xf32> to vector<1x1xf32>
      %50 = vector.shape_cast %47 : vector<1x1xf32> to vector<1x1x1xf32>
      tpu.vector_store %arg10[%c0_39, %c0_40, %c0_41], %50 {strides = array<i32>} : memref<1x1x1xf32, #tpu.memory_space<vmem>>, vector<1x1x1xf32>,
      %c0_42 = arith.constant 0 : index
      %c0_43 = arith.constant 0 : index
      %51 = vector.load %arg13[%c0_42, %c0_43] : memref<1x32xf32, #tpu.memory_space<vmem>>, vector<1x32xf32>
      %c0_44 = arith.constant 0 : index
      %c0_45 = arith.constant 0 : index
      %52 = vector.load %arg12[%c0_44, %c0_45] : memref<1x1xf32, #tpu.memory_space<vmem>>, vector<1x1xf32>
      %cst_46 = arith.constant 1.000000e+00 : f32
      %53 = vector.broadcast %cst_46 : f32 to vector<1x1xf32>
      %54 = arith.divf %53, %52 : vector<1x1xf32>
      %55 = vector.broadcast %54 : vector<1x1xf32> to vector<1x32xf32>
      %56 = arith.mulf %51, %55 : vector<1x32xf32>
      %c0_47 = arith.constant 0 : index
      %c0_48 = arith.constant 0 : index
      %c0_49 = arith.constant 0 : index
      %57 = vector.load %arg7[%c0_47, %c0_48, %c0_49] : memref<1x1x32xf32, #tpu.memory_space<vmem>>, vector<1x1x32xf32>
      %58 = vector.shape_cast %57 : vector<1x1x32xf32> to vector<1x32xf32>
      %59 = vector.shape_cast %56 : vector<1x32xf32> to vector<1x1x32xf32>
      tpu.vector_store %arg7[%c0_47, %c0_48, %c0_49], %59 {strides = array<i32>} : memref<1x1x32xf32, #tpu.memory_space<vmem>>, vector<1x1x32xf32>,
    } else {
    }
    return
  }
  func.func @transform_0(%arg0: i32, %arg1: i32) -> (i32, i32) {
    %c0_i32 = arith.constant 0 : i32
    %c0_i32_0 = arith.constant 0 : i32
    %c0_i32_1 = arith.constant 0 : i32
    return %c0_i32, %c0_i32_0 : i32, i32
  }
  func.func @transform_1(%arg0: i32, %arg1: i32) -> (i32, i32) {
    %c0_i32 = arith.constant 0 : i32
    %c0_i32_0 = arith.constant 0 : i32
    %c0_i32_1 = arith.constant 0 : i32
    return %c0_i32, %c0_i32_0 : i32, i32
  }
  func.func @transform_2(%arg0: i32, %arg1: i32) -> (i32, i32, i32) {
    %c0_i32 = arith.constant 0 : i32
    %c0_i32_0 = arith.constant 0 : i32
    return %arg0, %arg1, %c0_i32 : i32, i32, i32
  }
  func.func @transform_3(%arg0: i32, %arg1: i32) -> (i32, i32) {
    %c0_i32 = arith.constant 0 : i32
    %c0_i32_0 = arith.constant 0 : i32
    %c0_i32_1 = arith.constant 0 : i32
    return %c0_i32, %c0_i32_0 : i32, i32
  }
  func.func @transform_4(%arg0: i32, %arg1: i32) -> (i32, i32) {
    %c0_i32 = arith.constant 0 : i32
    %c0_i32_0 = arith.constant 0 : i32
    %c0_i32_1 = arith.constant 0 : i32
    return %c0_i32, %c0_i32_0 : i32, i32
  }
  func.func @transform_5(%arg0: i32, %arg1: i32) -> (i32, i32, i32) {
    %c0_i32 = arith.constant 0 : i32
    %c0_i32_0 = arith.constant 0 : i32
    %c0_i32_1 = arith.constant 0 : i32
    return %arg0, %c0_i32, %c0_i32_0 : i32, i32, i32
  }
  func.func @transform_6(%arg0: i32, %arg1: i32) -> (i32, i32, i32) {
    %c0_i32 = arith.constant 0 : i32
    %c0_i32_0 = arith.constant 0 : i32
    return %arg0, %c0_i32, %arg1 : i32, i32, i32
  }
  func.func @transform_7(%arg0: i32, %arg1: i32) -> (i32, i32, i32) {
    %c0_i32 = arith.constant 0 : i32
    %c0_i32_0 = arith.constant 0 : i32
    %c0_i32_1 = arith.constant 0 : i32
    return %arg0, %c0_i32, %c0_i32_0 : i32, i32, i32
  }
  func.func @transform_8(%arg0: i32, %arg1: i32) -> (i32, i32, i32) {
    %c0_i32 = arith.constant 0 : i32
    %c0_i32_0 = arith.constant 0 : i32
    %c0_i32_1 = arith.constant 0 : i32
    return %arg0, %c0_i32, %c0_i32_0 : i32, i32, i32
  }
}

</mosaic_0001>

<llo_original>
// kernel: tpu_custom_call.1
$region0: #{tpu_custom_call.1}
  #allocation0 [shape = 'u32[]', space=smem, size = 0x4, offset = 0x4, fixed_abs, tag = 'smem constant byte address 0x4 - core index']
  #allocation1 [shape = 'u32[144,128]{1,0:T(1,128)}', space=vmem, size = 0x12000, scoped, tag = 'internal scratch']
  #allocation2 [shape = 'f32[1,1]{1,0:T(1,128)}', space=vmem, size = 0x200, scoped, tag = 'scratch operand']
  #allocation3 [shape = 'f32[1,1]{1,0:T(1,128)}', space=vmem, size = 0x200, scoped, tag = 'scratch operand']
  #allocation4 [shape = 'f32[1,32]{1,0:T(1,128)}', space=vmem, size = 0x200, scoped, tag = 'scratch operand']
  #allocation5 [shape = 'f32[1,1]{1,0:T(1,128)S(1)}', space=vmem, size = 0x200, scoped, tag = 'scoped memory for tpu_custom_call.1']
  %s0 = inlined_call_operand.vmem [shape: f32[1,32], index: 0, kind: input, shape index: {}]
  %s1 = inlined_call_operand.<no memory space> [shape: f32[1,1], index: 1, kind: input, shape index: {}]
  %s2 = inlined_call_operand.hbm [shape: f32[2,8,32], index: 2, kind: input, shape index: {}]
  %s3 = inlined_call_operand.hbm [shape: f32[32,32], index: 3, kind: input, shape index: {}]
  %s4 = inlined_call_operand.vmem [shape: f32[1,32], index: 4, kind: input, shape index: {}]
  %s5 = inlined_call_operand.hbm [shape: f32[2,1,32], index: 5, kind: output, shape index: {0}]
  %s6 = inlined_call_operand.hbm [shape: f32[2,1,8], index: 6, kind: output, shape index: {1}]
  %s7 = inlined_call_operand.vmem [shape: f32[2,1,1], index: 7, kind: output, shape index: {2}]
  %s8 = inlined_call_operand.vmem [shape: f32[2,1,1], index: 8, kind: output, shape index: {3}]
  %9 = xla_tuple %s5, %s6, %s7, %s8
  %s10 = sld [smem:[#allocation0]]
  $region93: #{tpu_custom_call.1} parent=0
    _
  %s12 = ssub.s32 1, %s10
  %s13 = scalar_select 0, %s12, %s10
  %v14 = vstv %s1
  %15 = vst [vmem:[#allocation5] sm:$0x1] %v14
  $region1: #{tpu_custom_call.1} parent=0
    #allocation6 [shape = 'u8[8192]{0}', space=vmem, size = 0x2000, scoped, tag = 'input window, operand 2']
    #allocation7 [shape = 's32[2]{0}', space=sflag, size = 0x8, scoped, tag = 'scoped memory for tpu_custom_call.1']
    #allocation8 [shape = 's32[2]{0}', space=sflag, size = 0x8, scoped, tag = 'scoped memory for tpu_custom_call.1']
    #allocation9 [shape = 'u8[16384]{0}', space=vmem, size = 0x4000, scoped, tag = 'input window, operand 3, single buffered']
    #allocation10 [shape = 's32[1]{0}', space=sflag, size = 0x4, scoped, tag = 'scoped memory for tpu_custom_call.1']
    #allocation11 [shape = 'u8[1024]{0}', space=vmem, size = 0x400, scoped, tag = 'output window, operand 0']
    #allocation12 [shape = 'u8[1024]{0}', space=vmem, size = 0x400, scoped, tag = 'output window, operand 1']
    #allocation13 [shape = 's32[2]{0}', space=sflag, size = 0x8, scoped, tag = 'scoped memory for tpu_custom_call.1']
    %16 = vsyncpa [#allocation7], 0
    %s17 = scalar_lea.sflag [#allocation7], 1
    %18 = vsyncpa %s17, 0
    %19 = vsyncpa [#allocation10], 0
    %20 = vsyncpa [#allocation8], 0
    %s21 = scalar_lea.sflag [#allocation8], 1
    %22 = vsyncpa %s21, 0
    %23 = vsyncpa [#allocation13], 0
    %s24 = scalar_lea.sflag [#allocation13], 1
    %25 = vsyncpa %s24, 0
    loop: start=0, step=1, limit=4
    $region2: #{tpu_custom_call.1} parent=1 // loop_pre_header
      _
    $region3: #{tpu_custom_call.1} parent=1 // loop_header
      %s27 = sphi 0, %s31
      %p28 = scmp.ge.s32.totalorder %s27, 4
      %s34 = sphi 0, %s46
      %s35 = sphi 0, %s42
      %s36 = sphi 0, %s34
      %s37 = sphi 0, %s35
      %s38 = sphi 0, %s36
      %s39 = sphi 0, %s37
      %s47 = sphi 0, %s47
      %s49 = sphi 0, %s47
      %s50 = sphi 0, %s49
      %s64 = sphi 0, %s50
      %s68 = sphi 0, %s68
      %s70 = sphi 0, %s68
      %s71 = sphi 0, %s70
      %s85 = sphi 0, %s71
      %s93 = sphi 0, %s95
      %s96 = sphi 0, %s93
      %s97 = sphi 0, %s96
      %s113 = sphi 0, %s97
      %s117 = sphi 0, %s117
      %s119 = sphi 0, %s117
      %s120 = sphi 0, %s119
      %s134 = sphi 0, %s120
      %s138 = sphi 0, %s138
      %s140 = sphi 0, %s138
      %s141 = sphi 0, %s140
      %s155 = sphi 0, %s141
      %s161 = sphi 0, %s163
      %s164 = sphi 0, %s161
      %s165 = sphi 0, %s164
      %s181 = sphi 0, %s165
      %s189 = sphi 0, %s191
      %s192 = sphi 0, %s189
      %s193 = sphi 0, %s192
      %s209 = sphi 0, %s193
      %s215 = sphi 0, %s217
      %s218 = sphi 0, %s215
      %s219 = sphi 0, %s218
      %s235 = sphi 0, %s219
      %s241 = sphi 0, %s243
      %s244 = sphi 0, %s241
      %s245 = sphi 0, %s244
      %s261 = sphi 0, %s245
    $region4: #{tpu_custom_call.1} parent=1 // loop_header_branch
      %30 = sbr.rel (%p28) target = $region8
    $region5: #{tpu_custom_call.1} parent=1 // loop_body
      %s32 = ssub.s32 %s27, 1
      %s33 = ssub.s32 %s27, 2
      %s40 = sadd.s32 1, %s35
      %p41 = scmp.ge.s32.totalorder %s40, 1
      %s42 = scalar_select %p41, 0, %s40
      %s43 = sadd.s32 1, %s34
      %s44 = scalar_select %p41, %s43, %s34
      %p45 = scmp.ge.s32.totalorder %s44, 2
      %s46 = scalar_select %p45, 0, %s44
      %s48 = sadd.s32 %s47, 1
      %p51 = scmp.eq.s32.totalorder %s27, 1
      %p52 = scmp.ne.s32.totalorder %s47, %s49
      %p53 = scmp.eq.s32.totalorder %s27, 0
      %p54 = por %p52, %p53
      %p55 = scmp.ne.s32.totalorder %s47, %s49
      %p56 = scmp.eq.s32.totalorder %s32, 1
      %p57 = por %p55, %p56
      %p58 = scmp.ne.s32.totalorder %s49, %s50
      %p59 = scmp.eq.s32.totalorder %s32, 0
      %p60 = por %p58, %p59
      %p61 = scmp.ne.s32.totalorder %s49, %s50
      %p62 = scmp.eq.s32.totalorder %s33, 1
      %p63 = por %p61, %p62
      %p65 = scmp.ne.s32.totalorder %s50, %s64
      %p66 = scmp.eq.s32.totalorder %s33, 0
      %p67 = por %p65, %p66
      %s69 = sadd.s32 %s68, 1
      %p72 = scmp.eq.s32.totalorder %s27, 1
      %p73 = scmp.ne.s32.totalorder %s68, %s70
      %p74 = scmp.eq.s32.totalorder %s27, 0
      %p75 = por %p73, %p74
      %p76 = scmp.ne.s32.totalorder %s68, %s70
      %p77 = scmp.eq.s32.totalorder %s32, 1
      %p78 = por %p76, %p77
      %p79 = scmp.ne.s32.totalorder %s70, %s71
      %p80 = scmp.eq.s32.totalorder %s32, 0
      %p81 = por %p79, %p80
      %p82 = scmp.ne.s32.totalorder %s70, %s71
      %p83 = scmp.eq.s32.totalorder %s33, 1
      %p84 = por %p82, %p83
      %p86 = scmp.ne.s32.totalorder %s71, %s85
      %p87 = scmp.eq.s32.totalorder %s33, 0
      %p88 = por %p86, %p87
      %s89 = ssub.s32 %s34, %s46
      %s90 = ssub.s32 %s35, %s42
      %s91 = sor.u32 %s89, %s90
      %p92 = scmp.eq.s32.totalorder %s91, 0
      %s94 = sadd.s32 %s93, 1
      %s95 = scalar_select %p92, %s93, %s94
      %p98 = pneg %p92
      %p99 = scmp.eq.s32.totalorder %s27, 1
      %p100 = por %p98, %p99
      %p101 = scmp.ne.s32.totalorder %s93, %s96
      %p102 = scmp.eq.s32.totalorder %s27, 0
      %p103 = por %p101, %p102
      %p104 = scmp.ne.s32.totalorder %s93, %s96
      %p105 = scmp.eq.s32.totalorder %s32, 1
      %p106 = por %p104, %p105
      %p107 = scmp.ne.s32.totalorder %s96, %s97
      %p108 = scmp.eq.s32.totalorder %s32, 0
      %p109 = por %p107, %p108
      %p110 = scmp.ne.s32.totalorder %s96, %s97
      %p111 = scmp.eq.s32.totalorder %s33, 1
      %p112 = por %p110, %p111
      %p114 = scmp.ne.s32.totalorder %s97, %s113
      %p115 = scmp.eq.s32.totalorder %s33, 0
      %p116 = por %p114, %p115
      %s118 = sadd.s32 %s117, 1
      %p121 = scmp.eq.s32.totalorder %s27, 1
      %p122 = scmp.ne.s32.totalorder %s117, %s119
      %p123 = scmp.eq.s32.totalorder %s27, 0
      %p124 = por %p122, %p123
      %p125 = scmp.ne.s32.totalorder %s117, %s119
      %p126 = scmp.eq.s32.totalorder %s32, 1
      %p127 = por %p125, %p126
      %p128 = scmp.ne.s32.totalorder %s119, %s120
      %p129 = scmp.eq.s32.totalorder %s32, 0
      %p130 = por %p128, %p129
      %p131 = scmp.ne.s32.totalorder %s119, %s120
      %p132 = scmp.eq.s32.totalorder %s33, 1
      %p133 = por %p131, %p132
      %p135 = scmp.ne.s32.totalorder %s120, %s134
      %p136 = scmp.eq.s32.totalorder %s33, 0
      %p137 = por %p135, %p136
      %s139 = sadd.s32 %s138, 1
      %p142 = scmp.eq.s32.totalorder %s27, 1
      %p143 = scmp.ne.s32.totalorder %s138, %s140
      %p144 = scmp.eq.s32.totalorder %s27, 0
      %p145 = por %p143, %p144
      %p146 = scmp.ne.s32.totalorder %s138, %s140
      %p147 = scmp.eq.s32.totalorder %s32, 1
      %p148 = por %p146, %p147
      %p149 = scmp.ne.s32.totalorder %s140, %s141
      %p150 = scmp.eq.s32.totalorder %s32, 0
      %p151 = por %p149, %p150
      %p152 = scmp.ne.s32.totalorder %s140, %s141
      %p153 = scmp.eq.s32.totalorder %s33, 1
      %p154 = por %p152, %p153
      %p156 = scmp.ne.s32.totalorder %s141, %s155
      %p157 = scmp.eq.s32.totalorder %s33, 0
      %p158 = por %p156, %p157
      %s159 = ssub.s32 %s34, %s46
      %p160 = scmp.eq.s32.totalorder %s159, 0
      %s162 = sadd.s32 %s161, 1
      %s163 = scalar_select %p160, %s161, %s162
      %p166 = pneg %p160
      %p167 = scmp.eq.s32.totalorder %s27, 1
      %p168 = por %p166, %p167
      %p169 = scmp.ne.s32.totalorder %s161, %s164
      %p170 = scmp.eq.s32.totalorder %s27, 0
      %p171 = por %p169, %p170
      %p172 = scmp.ne.s32.totalorder %s161, %s164
      %p173 = scmp.eq.s32.totalorder %s32, 1
      %p174 = por %p172, %p173
      %p175 = scmp.ne.s32.totalorder %s164, %s165
      %p176 = scmp.eq.s32.totalorder %s32, 0
      %p177 = por %p175, %p176
      %p178 = scmp.ne.s32.totalorder %s164, %s165
      %p179 = scmp.eq.s32.totalorder %s33, 1
      %p180 = por %p178, %p179
      %p182 = scmp.ne.s32.totalorder %s165, %s181
      %p183 = scmp.eq.s32.totalorder %s33, 0
      %p184 = por %p182, %p183
      %s185 = ssub.s32 %s34, %s46
      %s186 = ssub.s32 %s35, %s42
      %s187 = sor.u32 %s185, %s186
      %p188 = scmp.eq.s32.totalorder %s187, 0
      %s190 = sadd.s32 %s189, 1
      %s191 = scalar_select %p188, %s189, %s190
      %p194 = pneg %p188
      %p195 = scmp.eq.s32.totalorder %s27, 1
      %p196 = por %p194, %p195
      %p197 = scmp.ne.s32.totalorder %s189, %s192
      %p198 = scmp.eq.s32.totalorder %s27, 0
      %p199 = por %p197, %p198
      %p200 = scmp.ne.s32.totalorder %s189, %s192
      %p201 = scmp.eq.s32.totalorder %s32, 1
      %p202 = por %p200, %p201
      %p203 = scmp.ne.s32.totalorder %s192, %s193
      %p204 = scmp.eq.s32.totalorder %s32, 0
      %p205 = por %p203, %p204
      %p206 = scmp.ne.s32.totalorder %s192, %s193
      %p207 = scmp.eq.s32.totalorder %s33, 1
      %p208 = por %p206, %p207
      %p210 = scmp.ne.s32.totalorder %s193, %s209
      %p211 = scmp.eq.s32.totalorder %s33, 0
      %p212 = por %p210, %p211
      %s213 = ssub.s32 %s34, %s46
      %p214 = scmp.eq.s32.totalorder %s213, 0
      %s216 = sadd.s32 %s215, 1
      %s217 = scalar_select %p214, %s215, %s216
      %p220 = pneg %p214
      %p221 = scmp.eq.s32.totalorder %s27, 1
      %p222 = por %p220, %p221
      %p223 = scmp.ne.s32.totalorder %s215, %s218
      %p224 = scmp.eq.s32.totalorder %s27, 0
      %p225 = por %p223, %p224
      %p226 = scmp.ne.s32.totalorder %s215, %s218
      %p227 = scmp.eq.s32.totalorder %s32, 1
      %p228 = por %p226, %p227
      %p229 = scmp.ne.s32.totalorder %s218, %s219
      %p230 = scmp.eq.s32.totalorder %s32, 0
      %p231 = por %p229, %p230
      %p232 = scmp.ne.s32.totalorder %s218, %s219
      %p233 = scmp.eq.s32.totalorder %s33, 1
      %p234 = por %p232, %p233
      %p236 = scmp.ne.s32.totalorder %s219, %s235
      %p237 = scmp.eq.s32.totalorder %s33, 0
      %p238 = por %p236, %p237
      %s239 = ssub.s32 %s34, %s46
      %p240 = scmp.eq.s32.totalorder %s239, 0
      %s242 = sadd.s32 %s241, 1
      %s243 = scalar_select %p240, %s241, %s242
      %p246 = pneg %p240
      %p247 = scmp.eq.s32.totalorder %s27, 1
      %p248 = por %p246, %p247
      %p249 = scmp.ne.s32.totalorder %s241, %s244
      %p250 = scmp.eq.s32.totalorder %s27, 0
      %p251 = por %p249, %p250
      %p252 = scmp.ne.s32.totalorder %s241, %s244
      %p253 = scmp.eq.s32.totalorder %s32, 1
      %p254 = por %p252, %p253
      %p255 = scmp.ne.s32.totalorder %s244, %s245
      %p256 = scmp.eq.s32.totalorder %s32, 0
      %p257 = por %p255, %p256
      %p258 = scmp.ne.s32.totalorder %s244, %s245
      %p259 = scmp.eq.s32.totalorder %s33, 1
      %p260 = por %p258, %p259
      %p262 = scmp.ne.s32.totalorder %s245, %s261
      %p263 = scmp.eq.s32.totalorder %s33, 0
      %p264 = por %p262, %p263
      %p265 = scmp.le.s32.totalorder 1, %s27
      %p266 = scmp.lt.s32.totalorder %s27, 3
      %p267 = pnand %p265, %p266
      %p268 = pneg %p267
      // Predicated region
      $region9: #{tpu_custom_call.1} parent=5 // pred_check
        _
      $region10: #{tpu_custom_call.1} parent=5 // pred_check_branch
        %270 = sbr.rel (%p267) target = $region12
      $region11: #{tpu_custom_call.1} parent=5 // pred_region
        %s271 = ssub.s32 %s27, 1
        // Predicated region
        $region13: #{tpu_custom_call.1} parent=11 // pred_check
          %p272 = pneg %p60
        $region14: #{tpu_custom_call.1} parent=11 // pred_check_branch
          %274 = sbr.rel (%p272) target = $region16
        $region15: #{tpu_custom_call.1} parent=11 // pred_region
          _
        $region16: #{tpu_custom_call.1} parent=11 // pred_fallthru
          _
        // Predicated region
        $region17: #{tpu_custom_call.1} parent=11 // pred_check
          %p275 = pneg %p81
        $region18: #{tpu_custom_call.1} parent=11 // pred_check_branch
          %277 = sbr.rel (%p275) target = $region20
        $region19: #{tpu_custom_call.1} parent=11 // pred_region
          _
        $region20: #{tpu_custom_call.1} parent=11 // pred_fallthru
          _
        // Predicated region
        $region21: #{tpu_custom_call.1} parent=11 // pred_check
          %p278 = pneg %p130
        $region22: #{tpu_custom_call.1} parent=11 // pred_check_branch
          %280 = sbr.rel (%p278) target = $region24
        $region23: #{tpu_custom_call.1} parent=11 // pred_region
          %s282 = ssub.s32 512, 512
          %283 = vsyncadd [#allocation10], %s282
          %s284 = sshll.u32 [#allocation9], 4
          %s285 = int_to_ptr.vmem [resolvable:$true] %s284
          %290 = dma.hbm_to_vmem [thread:$0]  %s3, 512, %s285, [#allocation10], 128, 128, 8
        $region24: #{tpu_custom_call.1} parent=11 // pred_fallthru
          _
        // Predicated region
        $region25: #{tpu_custom_call.1} parent=11 // pred_check
          %p291 = pneg %p151
        $region26: #{tpu_custom_call.1} parent=11 // pred_check_branch
          %293 = sbr.rel (%p291) target = $region28
        $region27: #{tpu_custom_call.1} parent=11 // pred_region
          _
        $region28: #{tpu_custom_call.1} parent=11 // pred_fallthru
          _
      $region12: #{tpu_custom_call.1} parent=5 // pred_fallthru
        _
      %p294 = scmp.lt.s32.totalorder %s27, 2
      // Predicated region
      $region29: #{tpu_custom_call.1} parent=5 // pred_check
        %p295 = pneg %p294
      $region30: #{tpu_custom_call.1} parent=5 // pred_check_branch
        %297 = sbr.rel (%p295) target = $region32
      $region31: #{tpu_custom_call.1} parent=5 // pred_region
        // Predicated region
        $region33: #{tpu_custom_call.1} parent=31 // pred_check
          %p298 = pneg %p103
        $region34: #{tpu_custom_call.1} parent=31 // pred_check_branch
          %300 = sbr.rel (%p298) target = $region36
        $region35: #{tpu_custom_call.1} parent=31 // pred_region
          %s301 = sand.u32 %s93, 1
          %s302 = scalar_lea.sflag [#allocation7], %s301
          %s303 = sand.u32 %s93, 1
          %s304 = smul.addr %s303, 8
          %s305 = scalar_lea.vmem [#allocation6], %s304
          %s307 = ssub.s32 128, 128
          %308 = vsyncadd %s302, %s307
          %s309 = sadd.s32 %s35, %s34
          %s310 = smul.addr %s309, 128
          %s311 = scalar_lea.hbm %s2, %s310
          %s313 = sshll.u32 %s305, 4
          %s314 = int_to_ptr.vmem [resolvable:$true] %s313
          %316 = dma.hbm_to_vmem [thread:$0]  %s311, 128, %s314, %s302
        $region36: #{tpu_custom_call.1} parent=31 // pred_fallthru
          _
      $region32: #{tpu_custom_call.1} parent=5 // pred_fallthru
        _
      %p317 = scmp.le.s32.totalorder 1, %s27
      %p318 = scmp.lt.s32.totalorder %s27, 3
      %p319 = pnand %p317, %p318
      %p320 = pneg %p319
      // Predicated region
      $region37: #{tpu_custom_call.1} parent=5 // pred_check
        _
      $region38: #{tpu_custom_call.1} parent=5 // pred_check_branch
        %322 = sbr.rel (%p319) target = $region40
      $region39: #{tpu_custom_call.1} parent=5 // pred_region
        %s323 = ssub.s32 %s27, 1
        %s324 = sand.u32 %s96, 1
        %s325 = scalar_lea.sflag [#allocation7], %s324
        %s326 = sand.u32 %s96, 1
        %s327 = smul.addr %s326, 8
        %s328 = scalar_lea.vmem [#allocation6], %s327
        // Predicated region
        $region41: #{tpu_custom_call.1} parent=39 // pred_check
          %p329 = pneg %p109
        $region42: #{tpu_custom_call.1} parent=39 // pred_check_branch
          %331 = sbr.rel (%p329) target = $region44
        $region43: #{tpu_custom_call.1} parent=39 // pred_region
          %332 = dma.done %s325, 128
        $region44: #{tpu_custom_call.1} parent=39 // pred_fallthru
          _
        // Predicated region
        $region45: #{tpu_custom_call.1} parent=39 // pred_check
          %p333 = pneg %p130
        $region46: #{tpu_custom_call.1} parent=39 // pred_check_branch
          %335 = sbr.rel (%p333) target = $region48
        $region47: #{tpu_custom_call.1} parent=39 // pred_region
          %336 = dma.done [#allocation10], 512
        $region48: #{tpu_custom_call.1} parent=39 // pred_fallthru
          _
        %p337 = pneg %p60
        %p338 = pneg %p57
        %p339 = pneg %p81
        %p340 = pneg %p78
        %s341 = sand.u32 %s96, 1
        %s342 = scalar_lea.sflag [#allocation7], %s341
        %s343 = sand.u32 %s96, 1
        %s344 = smul.addr %s343, 8
        %s345 = scalar_lea.vmem [#allocation6], %s344
        %p346 = pneg %p109
        %p347 = pneg %p106
        %p348 = pneg %p130
        %p349 = pneg %p127
        %p350 = pneg %p151
        %p351 = pneg %p148
        %p352 = pneg %p177
        %p353 = pneg %p174
        %s354 = sand.u32 %s164, 1
        %s355 = scalar_lea.sflag [#allocation8], %s354
        %s356 = sand.u32 %s164, 1
        %s357 = scalar_lea.vmem [#allocation11], %s356
        %p358 = pneg %p205
        %p359 = pneg %p202
        %s360 = sand.u32 %s192, 1
        %s361 = scalar_lea.sflag [#allocation13], %s360
        %s362 = sand.u32 %s192, 1
        %s363 = scalar_lea.vmem [#allocation12], %s362
        %p364 = pneg %p231
        %p365 = pneg %p228
        %p366 = scmp.lt.s32.totalorder %s36, 1
        %s367 = scalar_select %p366, %s36, 1
        %s368 = scalar_lea.vmem %s7, %s367
        %p369 = pneg %p257
        %p370 = pneg %p254
        %p371 = scmp.lt.s32.totalorder %s36, 1
        %s372 = scalar_select %p371, %s36, 1
        %s373 = scalar_lea.vmem %s8, %s372
        %p374 = scmp.lt.s32.totalorder %s36, 1
        %s375 = scalar_select %p374, %s36, 1
        %s376 = scalar_lea.vmem %s7, %s375
        %p377 = scmp.lt.s32.totalorder %s36, 1
        %s378 = scalar_select %p377, %s36, 1
        %s379 = scalar_lea.vmem %s8, %s378
        %p380 = scmp.eq.s32.totalorder %s37, 0
        // Predicated region
        $region49: #{tpu_custom_call.1} parent=39 // pred_check
          %p381 = pneg %p380
        $region50: #{tpu_custom_call.1} parent=39 // pred_check_branch
          %383 = sbr.rel (%p381) target = $region52
        $region51: #{tpu_custom_call.1} parent=39 // pred_region
          %vm384 = vcmask 0
          %385 = vst.msk [vmem:[#allocation2] sm:$0x1] %vm384, -inf
          %386 = vst.msk [vmem:[#allocation3] sm:$0x1] %vm384, 0.0
          %vm387 = vcmask 253952
          %388 = vst.msk [vmem:[#allocation4] sm:$0x1] %vm387, 0.0
        $region52: #{tpu_custom_call.1} parent=39 // pred_fallthru
          _
        %v389 = vld [vmem:[%s328] sm:$0xff]
        %v390 = vld [vmem:[%s0] sm:$0x1]
        %v391 = vld [vmem:[#allocation5] sm:$0x1]
        %393 = vset.pattern.permute.xlu0 0
        %394 = vperm.xlu0 %393, %v391
        %v395 = vpop.permute.xlu0 %394
        %v397 = vlaneseq
        %v398 = vshrl.u32 %v397, 7
        %v399 = vsub.s32 0, %v398
        %v400 = vrot.slane %v395, %v399
        %vm401 = vcmask 261120
        %v403 = vsel %vm401, %v390, 0
        %v406 = vsel %vm401, %v389, 0
        %408 = vmatprep.subr.mxu0 0.0
        %v409 = vand.u32 %v406, 4294901760
        %410 = vmatpush1.xpose.msra.mxu0 %v409
        %411 = vmatprep.subr.mxu0 0.0
        %412 = vmatpush1.xpose.msra.mxu0 0.0
        %413 = vmatprep.subr.mxu0 0.0
        %414 = vmatpush1.xpose.msra.mxu0 0.0
        %415 = vmatprep.subr.mxu0 0.0
        %416 = vmatpush1.xpose.msra.mxu0 0.0
        %417 = vmatprep.subr.mxu0 0.0
        %418 = vmatpush1.xpose.msra.mxu0 0.0
        %419 = vmatprep.subr.mxu0 0.0
        %420 = vmatpush1.xpose.msra.mxu0 0.0
        %421 = vmatprep.subr.mxu0 0.0
        %422 = vmatpush1.xpose.msra.mxu0 0.0
        %423 = vmatprep.subr.mxu0 0.0
        %424 = vmatpush1.xpose.msra.mxu0 0.0
        %425 = vmatprep.subr.mxu0 0.0
        %426 = vmatpush1.xpose.msra.mxu0 0.0
        %427 = vmatprep.subr.mxu0 0.0
        %428 = vmatpush1.xpose.msra.mxu0 0.0
        %429 = vmatprep.subr.mxu0 0.0
        %430 = vmatpush1.xpose.msra.mxu0 0.0
        %431 = vmatprep.subr.mxu0 0.0
        %432 = vmatpush1.xpose.msra.mxu0 0.0
        %433 = vmatprep.subr.mxu0 0.0
        %434 = vmatpush1.xpose.msra.mxu0 0.0
        %435 = vmatprep.subr.mxu0 0.0
        %436 = vmatpush1.xpose.msra.mxu0 0.0
        %437 = vmatprep.subr.mxu0 0.0
        %438 = vmatpush1.xpose.msra.mxu0 0.0
        %439 = vmatprep.subr.mxu0 0.0
        %440 = vmatpush1.xpose.msra.mxu0 0.0
        %441 = vmatprep.subr.mxu0 0.0
        %442 = vmatpush1.xpose.msra.mxu0 0.0
        %443 = vmatprep.subr.mxu0 0.0
        %444 = vmatpush1.xpose.msra.mxu0 0.0
        %445 = vmatprep.subr.mxu0 0.0
        %446 = vmatpush1.xpose.msra.mxu0 0.0
        %447 = vmatprep.subr.mxu0 0.0
        %448 = vmatpush1.xpose.msra.mxu0 0.0
        %449 = vmatprep.subr.mxu0 0.0
        %450 = vmatpush1.xpose.msra.mxu0 0.0
        %451 = vmatprep.subr.mxu0 0.0
        %452 = vmatpush1.xpose.msra.mxu0 0.0
        %453 = vmatprep.subr.mxu0 0.0
        %454 = vmatpush1.xpose.msra.mxu0 0.0
        %455 = vmatprep.subr.mxu0 0.0
        %456 = vmatpush1.xpose.msra.mxu0 0.0
        %457 = vmatprep.subr.mxu0 0.0
        %458 = vmatpush1.xpose.msra.mxu0 0.0
        %459 = vmatprep.subr.mxu0 0.0
        %460 = vmatpush1.xpose.msra.mxu0 0.0
        %461 = vmatprep.subr.mxu0 0.0
        %462 = vmatpush1.xpose.msra.mxu0 0.0
        %463 = vmatprep.subr.mxu0 0.0
        %464 = vmatpush1.xpose.msra.mxu0 0.0
        %465 = vmatprep.subr.mxu0 0.0
        %466 = vmatpush1.xpose.msra.mxu0 0.0
        %467 = vmatprep.subr.mxu0 0.0
        %468 = vmatpush1.xpose.msra.mxu0 0.0
        %469 = vmatprep.subr.mxu0 0.0
        %470 = vmatpush1.xpose.msra.mxu0 0.0
        %471 = vmatprep.subr.mxu0 0.0
        %472 = vmatpush1.xpose.msra.mxu0 0.0
        %473 = vmatprep.mubr.f32.mxu0 0.0
        %v474 = vand.u32 %v403, 4294901760
        %v475 = vsub.f32 %v403, %v474
        %v476 = vand.u32 %v475, 4294901760
        %v477 = vsub.f32 %v475, %v476
        %v478 = vand.u32 %v477, 4294901760
        %479 = vmatmul.mubr.f32.gmra.mrb[0].mxu0 %v478
        %v480 = vpop.f32.mrb[0].mxu0
        %v481 = vadd.f32 %v400, %v480
        %v482 = vpop.f32.mrb[0].mxu0
        %483 = vdwg.mxu0
        %484 = vmatprep.subr.mxu0 0.0
        %v485 = vand.u32 %v406, 4294901760
        %v486 = vsub.f32 %v406, %v485
        %v487 = vand.u32 %v486, 4294901760
        %v488 = vsub.f32 %v486, %v487
        %v489 = vand.u32 %v488, 4294901760
        %490 = vmatpush1.xpose.msra.mxu0 %v489
        %491 = vmatprep.subr.mxu0 0.0
        %492 = vmatpush1.xpose.msra.mxu0 0.0
        %493 = vmatprep.subr.mxu0 0.0
        %494 = vmatpush1.xpose.msra.mxu0 0.0
        %495 = vmatprep.subr.mxu0 0.0
        %496 = vmatpush1.xpose.msra.mxu0 0.0
        %497 = vmatprep.subr.mxu0 0.0
        %498 = vmatpush1.xpose.msra.mxu0 0.0
        %499 = vmatprep.subr.mxu0 0.0
        %500 = vmatpush1.xpose.msra.mxu0 0.0
        %501 = vmatprep.subr.mxu0 0.0
        %502 = vmatpush1.xpose.msra.mxu0 0.0
        %503 = vmatprep.subr.mxu0 0.0
        %504 = vmatpush1.xpose.msra.mxu0 0.0
        %505 = vmatprep.subr.mxu0 0.0
        %506 = vmatpush1.xpose.msra.mxu0 0.0
        %507 = vmatprep.subr.mxu0 0.0
        %508 = vmatpush1.xpose.msra.mxu0 0.0
        %509 = vmatprep.subr.mxu0 0.0
        %510 = vmatpush1.xpose.msra.mxu0 0.0
        %511 = vmatprep.subr.mxu0 0.0
        %512 = vmatpush1.xpose.msra.mxu0 0.0
        %513 = vmatprep.subr.mxu0 0.0
        %514 = vmatpush1.xpose.msra.mxu0 0.0
        %515 = vmatprep.subr.mxu0 0.0
        %516 = vmatpush1.xpose.msra.mxu0 0.0
        %517 = vmatprep.subr.mxu0 0.0
        %518 = vmatpush1.xpose.msra.mxu0 0.0
        %519 = vmatprep.subr.mxu0 0.0
        %520 = vmatpush1.xpose.msra.mxu0 0.0
        %521 = vmatprep.subr.mxu0 0.0
        %522 = vmatpush1.xpose.msra.mxu0 0.0
        %523 = vmatprep.subr.mxu0 0.0
        %524 = vmatpush1.xpose.msra.mxu0 0.0
        %525 = vmatprep.subr.mxu0 0.0
        %526 = vmatpush1.xpose.msra.mxu0 0.0
        %527 = vmatprep.subr.mxu0 0.0
        %528 = vmatpush1.xpose.msra.mxu0 0.0
        %529 = vmatprep.subr.mxu0 0.0
        %530 = vmatpush1.xpose.msra.mxu0 0.0
        %531 = vmatprep.subr.mxu0 0.0
        %532 = vmatpush1.xpose.msra.mxu0 0.0
        %533 = vmatprep.subr.mxu0 0.0
        %534 = vmatpush1.xpose.msra.mxu0 0.0
        %535 = vmatprep.subr.mxu0 0.0
        %536 = vmatpush1.xpose.msra.mxu0 0.0
        %537 = vmatprep.subr.mxu0 0.0
        %538 = vmatpush1.xpose.msra.mxu0 0.0
        %539 = vmatprep.subr.mxu0 0.0
        %540 = vmatpush1.xpose.msra.mxu0 0.0
        %541 = vmatprep.subr.mxu0 0.0
        %542 = vmatpush1.xpose.msra.mxu0 0.0
        %543 = vmatprep.subr.mxu0 0.0
        %544 = vmatpush1.xpose.msra.mxu0 0.0
        %545 = vmatprep.subr.mxu0 0.0
        %546 = vmatpush1.xpose.msra.mxu0 0.0
        %547 = vmatprep.subr.mxu0 0.0
        %548 = vmatpush1.xpose.msra.mxu0 0.0
        %549 = vmatprep.subr.mxu0 0.0
        %550 = vmatpush1.xpose.msra.mxu0 0.0
        %551 = vmatprep.subr.mxu0 0.0
        %552 = vmatpush1.xpose.msra.mxu0 0.0
        %553 = vmatprep.mubr.f32.mxu0 0.0
        %v554 = vand.u32 %v403, 4294901760
        %555 = vmatmul.mubr.f32.gmra.mrb[0].mxu0 %v554
        %v556 = vpop.f32.mrb[0].mxu0
        %v557 = vadd.f32 %v481, %v556
        %v558 = vpop.f32.mrb[0].mxu0
        %559 = vdwg.mxu0
        %560 = vmatprep.subr.mxu0 0.0
        %v561 = vand.u32 %v406, 4294901760
        %v562 = vsub.f32 %v406, %v561
        %563 = vmatpush1.xpose.msra.mxu0 %v562
        %564 = vmatprep.subr.mxu0 0.0
        %565 = vmatpush1.xpose.msra.mxu0 0.0
        %566 = vmatprep.subr.mxu0 0.0
        %567 = vmatpush1.xpose.msra.mxu0 0.0
        %568 = vmatprep.subr.mxu0 0.0
        %569 = vmatpush1.xpose.msra.mxu0 0.0
        %570 = vmatprep.subr.mxu0 0.0
        %571 = vmatpush1.xpose.msra.mxu0 0.0
        %572 = vmatprep.subr.mxu0 0.0
        %573 = vmatpush1.xpose.msra.mxu0 0.0
        %574 = vmatprep.subr.mxu0 0.0
        %575 = vmatpush1.xpose.msra.mxu0 0.0
        %576 = vmatprep.subr.mxu0 0.0
        %577 = vmatpush1.xpose.msra.mxu0 0.0
        %578 = vmatprep.subr.mxu0 0.0
        %579 = vmatpush1.xpose.msra.mxu0 0.0
        %580 = vmatprep.subr.mxu0 0.0
        %581 = vmatpush1.xpose.msra.mxu0 0.0
        %582 = vmatprep.subr.mxu0 0.0
        %583 = vmatpush1.xpose.msra.mxu0 0.0
        %584 = vmatprep.subr.mxu0 0.0
        %585 = vmatpush1.xpose.msra.mxu0 0.0
        %586 = vmatprep.subr.mxu0 0.0
        %587 = vmatpush1.xpose.msra.mxu0 0.0
        %588 = vmatprep.subr.mxu0 0.0
        %589 = vmatpush1.xpose.msra.mxu0 0.0
        %590 = vmatprep.subr.mxu0 0.0
        %591 = vmatpush1.xpose.msra.mxu0 0.0
        %592 = vmatprep.subr.mxu0 0.0
        %593 = vmatpush1.xpose.msra.mxu0 0.0
        %594 = vmatprep.subr.mxu0 0.0
        %595 = vmatpush1.xpose.msra.mxu0 0.0
        %596 = vmatprep.subr.mxu0 0.0
        %597 = vmatpush1.xpose.msra.mxu0 0.0
        %598 = vmatprep.subr.mxu0 0.0
        %599 = vmatpush1.xpose.msra.mxu0 0.0
        %600 = vmatprep.subr.mxu0 0.0
        %601 = vmatpush1.xpose.msra.mxu0 0.0
        %602 = vmatprep.subr.mxu0 0.0
        %603 = vmatpush1.xpose.msra.mxu0 0.0
        %604 = vmatprep.subr.mxu0 0.0
        %605 = vmatpush1.xpose.msra.mxu0 0.0
        %606 = vmatprep.subr.mxu0 0.0
        %607 = vmatpush1.xpose.msra.mxu0 0.0
        %608 = vmatprep.subr.mxu0 0.0
        %609 = vmatpush1.xpose.msra.mxu0 0.0
        %610 = vmatprep.subr.mxu0 0.0
        %611 = vmatpush1.xpose.msra.mxu0 0.0
        %612 = vmatprep.subr.mxu0 0.0
        %613 = vmatpush1.xpose.msra.mxu0 0.0
        %614 = vmatprep.subr.mxu0 0.0
        %615 = vmatpush1.xpose.msra.mxu0 0.0
        %616 = vmatprep.subr.mxu0 0.0
        %617 = vmatpush1.xpose.msra.mxu0 0.0
        %618 = vmatprep.subr.mxu0 0.0
        %619 = vmatpush1.xpose.msra.mxu0 0.0
        %620 = vmatprep.subr.mxu0 0.0
        %621 = vmatpush1.xpose.msra.mxu0 0.0
        %622 = vmatprep.subr.mxu0 0.0
        %623 = vmatpush1.xpose.msra.mxu0 0.0
        %624 = vmatprep.subr.mxu0 0.0
        %625 = vmatpush1.xpose.msra.mxu0 0.0
        %626 = vmatprep.mubr.f32.mxu0 0.0
        %v627 = vand.u32 %v403, 4294901760
        %v628 = vsub.f32 %v403, %v627
        %629 = vmatmul.mubr.f32.gmra.mrb[0].mxu0 %v628
        %v630 = vpop.f32.mrb[0].mxu0
        %v631 = vadd.f32 %v557, %v630
        %v632 = vpop.f32.mrb[0].mxu0
        %633 = vdwg.mxu0
        %634 = vmatprep.subr.mxu0 0.0
        %v635 = vand.u32 %v406, 4294901760
        %636 = vmatpush1.xpose.msra.mxu0 %v635
        %637 = vmatprep.subr.mxu0 0.0
        %638 = vmatpush1.xpose.msra.mxu0 0.0
        %639 = vmatprep.subr.mxu0 0.0
        %640 = vmatpush1.xpose.msra.mxu0 0.0
        %641 = vmatprep.subr.mxu0 0.0
        %642 = vmatpush1.xpose.msra.mxu0 0.0
        %643 = vmatprep.subr.mxu0 0.0
        %644 = vmatpush1.xpose.msra.mxu0 0.0
        %645 = vmatprep.subr.mxu0 0.0
        %646 = vmatpush1.xpose.msra.mxu0 0.0
        %647 = vmatprep.subr.mxu0 0.0
        %648 = vmatpush1.xpose.msra.mxu0 0.0
        %649 = vmatprep.subr.mxu0 0.0
        %650 = vmatpush1.xpose.msra.mxu0 0.0
        %651 = vmatprep.subr.mxu0 0.0
        %652 = vmatpush1.xpose.msra.mxu0 0.0
        %653 = vmatprep.subr.mxu0 0.0
        %654 = vmatpush1.xpose.msra.mxu0 0.0
        %655 = vmatprep.subr.mxu0 0.0
        %656 = vmatpush1.xpose.msra.mxu0 0.0
        %657 = vmatprep.subr.mxu0 0.0
        %658 = vmatpush1.xpose.msra.mxu0 0.0
        %659 = vmatprep.subr.mxu0 0.0
        %660 = vmatpush1.xpose.msra.mxu0 0.0
        %661 = vmatprep.subr.mxu0 0.0
        %662 = vmatpush1.xpose.msra.mxu0 0.0
        %663 = vmatprep.subr.mxu0 0.0
        %664 = vmatpush1.xpose.msra.mxu0 0.0
        %665 = vmatprep.subr.mxu0 0.0
        %666 = vmatpush1.xpose.msra.mxu0 0.0
        %667 = vmatprep.subr.mxu0 0.0
        %668 = vmatpush1.xpose.msra.mxu0 0.0
        %669 = vmatprep.subr.mxu0 0.0
        %670 = vmatpush1.xpose.msra.mxu0 0.0
        %671 = vmatprep.subr.mxu0 0.0
        %672 = vmatpush1.xpose.msra.mxu0 0.0
        %673 = vmatprep.subr.mxu0 0.0
        %674 = vmatpush1.xpose.msra.mxu0 0.0
        %675 = vmatprep.subr.mxu0 0.0
        %676 = vmatpush1.xpose.msra.mxu0 0.0
        %677 = vmatprep.subr.mxu0 0.0
        %678 = vmatpush1.xpose.msra.mxu0 0.0
        %679 = vmatprep.subr.mxu0 0.0
        %680 = vmatpush1.xpose.msra.mxu0 0.0
        %681 = vmatprep.subr.mxu0 0.0
        %682 = vmatpush1.xpose.msra.mxu0 0.0
        %683 = vmatprep.subr.mxu0 0.0
        %684 = vmatpush1.xpose.msra.mxu0 0.0
        %685 = vmatprep.subr.mxu0 0.0
        %686 = vmatpush1.xpose.msra.mxu0 0.0
        %687 = vmatprep.subr.mxu0 0.0
        %688 = vmatpush1.xpose.msra.mxu0 0.0
        %689 = vmatprep.subr.mxu0 0.0
        %690 = vmatpush1.xpose.msra.mxu0 0.0
        %691 = vmatprep.subr.mxu0 0.0
        %692 = vmatpush1.xpose.msra.mxu0 0.0
        %693 = vmatprep.subr.mxu0 0.0
        %694 = vmatpush1.xpose.msra.mxu0 0.0
        %695 = vmatprep.subr.mxu0 0.0
        %696 = vmatpush1.xpose.msra.mxu0 0.0
        %697 = vmatprep.subr.mxu0 0.0
        %698 = vmatpush1.xpose.msra.mxu0 0.0
        %699 = vmatprep.mubr.f32.mxu0 0.0
        %v700 = vand.u32 %v403, 4294901760
        %v701 = vsub.f32 %v403, %v700
        %v702 = vand.u32 %v701, 4294901760
        %703 = vmatmul.mubr.f32.gmra.mrb[0].mxu0 %v702
        %v704 = vpop.f32.mrb[0].mxu0
        %v705 = vadd.f32 %v631, %v704
        %v706 = vpop.f32.mrb[0].mxu0
        %707 = vdwg.mxu0
        %708 = vmatprep.subr.mxu0 0.0
        %v709 = vand.u32 %v406, 4294901760
        %v710 = vsub.f32 %v406, %v709
        %v711 = vand.u32 %v710, 4294901760
        %712 = vmatpush1.xpose.msra.mxu0 %v711
        %713 = vmatprep.subr.mxu0 0.0
        %714 = vmatpush1.xpose.msra.mxu0 0.0
        %715 = vmatprep.subr.mxu0 0.0
        %716 = vmatpush1.xpose.msra.mxu0 0.0
        %717 = vmatprep.subr.mxu0 0.0
        %718 = vmatpush1.xpose.msra.mxu0 0.0
        %719 = vmatprep.subr.mxu0 0.0
        %720 = vmatpush1.xpose.msra.mxu0 0.0
        %721 = vmatprep.subr.mxu0 0.0
        %722 = vmatpush1.xpose.msra.mxu0 0.0
        %723 = vmatprep.subr.mxu0 0.0
        %724 = vmatpush1.xpose.msra.mxu0 0.0
        %725 = vmatprep.subr.mxu0 0.0
        %726 = vmatpush1.xpose.msra.mxu0 0.0
        %727 = vmatprep.subr.mxu0 0.0
        %728 = vmatpush1.xpose.msra.mxu0 0.0
        %729 = vmatprep.subr.mxu0 0.0
        %730 = vmatpush1.xpose.msra.mxu0 0.0
        %731 = vmatprep.subr.mxu0 0.0
        %732 = vmatpush1.xpose.msra.mxu0 0.0
        %733 = vmatprep.subr.mxu0 0.0
        %734 = vmatpush1.xpose.msra.mxu0 0.0
        %735 = vmatprep.subr.mxu0 0.0
        %736 = vmatpush1.xpose.msra.mxu0 0.0
        %737 = vmatprep.subr.mxu0 0.0
        %738 = vmatpush1.xpose.msra.mxu0 0.0
        %739 = vmatprep.subr.mxu0 0.0
        %740 = vmatpush1.xpose.msra.mxu0 0.0
        %741 = vmatprep.subr.mxu0 0.0
        %742 = vmatpush1.xpose.msra.mxu0 0.0
        %743 = vmatprep.subr.mxu0 0.0
        %744 = vmatpush1.xpose.msra.mxu0 0.0
        %745 = vmatprep.subr.mxu0 0.0
        %746 = vmatpush1.xpose.msra.mxu0 0.0
        %747 = vmatprep.subr.mxu0 0.0
        %748 = vmatpush1.xpose.msra.mxu0 0.0
        %749 = vmatprep.subr.mxu0 0.0
        %750 = vmatpush1.xpose.msra.mxu0 0.0
        %751 = vmatprep.subr.mxu0 0.0
        %752 = vmatpush1.xpose.msra.mxu0 0.0
        %753 = vmatprep.subr.mxu0 0.0
        %754 = vmatpush1.xpose.msra.mxu0 0.0
        %755 = vmatprep.subr.mxu0 0.0
        %756 = vmatpush1.xpose.msra.mxu0 0.0
        %757 = vmatprep.subr.mxu0 0.0
        %758 = vmatpush1.xpose.msra.mxu0 0.0
        %759 = vmatprep.subr.mxu0 0.0
        %760 = vmatpush1.xpose.msra.mxu0 0.0
        %761 = vmatprep.subr.mxu0 0.0
        %762 = vmatpush1.xpose.msra.mxu0 0.0
        %763 = vmatprep.subr.mxu0 0.0
        %764 = vmatpush1.xpose.msra.mxu0 0.0
        %765 = vmatprep.subr.mxu0 0.0
        %766 = vmatpush1.xpose.msra.mxu0 0.0
        %767 = vmatprep.subr.mxu0 0.0
        %768 = vmatpush1.xpose.msra.mxu0 0.0
        %769 = vmatprep.subr.mxu0 0.0
        %770 = vmatpush1.xpose.msra.mxu0 0.0
        %771 = vmatprep.subr.mxu0 0.0
        %772 = vmatpush1.xpose.msra.mxu0 0.0
        %773 = vmatprep.subr.mxu0 0.0
        %774 = vmatpush1.xpose.msra.mxu0 0.0
        %775 = vmatprep.mubr.f32.mxu0 0.0
        %v776 = vand.u32 %v403, 4294901760
        %777 = vmatmul.mubr.f32.gmra.mrb[0].mxu0 %v776
        %v778 = vpop.f32.mrb[0].mxu0
        %v779 = vadd.f32 %v705, %v778
        %v780 = vpop.f32.mrb[0].mxu0
        %781 = vdwg.mxu0
        %782 = vmatprep.subr.mxu0 0.0
        %v783 = vand.u32 %v406, 4294901760
        %784 = vmatpush1.xpose.msra.mxu0 %v783
        %785 = vmatprep.subr.mxu0 0.0
        %786 = vmatpush1.xpose.msra.mxu0 0.0
        %787 = vmatprep.subr.mxu0 0.0
        %788 = vmatpush1.xpose.msra.mxu0 0.0
        %789 = vmatprep.subr.mxu0 0.0
        %790 = vmatpush1.xpose.msra.mxu0 0.0
        %791 = vmatprep.subr.mxu0 0.0
        %792 = vmatpush1.xpose.msra.mxu0 0.0
        %793 = vmatprep.subr.mxu0 0.0
        %794 = vmatpush1.xpose.msra.mxu0 0.0
        %795 = vmatprep.subr.mxu0 0.0
        %796 = vmatpush1.xpose.msra.mxu0 0.0
        %797 = vmatprep.subr.mxu0 0.0
        %798 = vmatpush1.xpose.msra.mxu0 0.0
        %799 = vmatprep.subr.mxu0 0.0
        %800 = vmatpush1.xpose.msra.mxu0 0.0
        %801 = vmatprep.subr.mxu0 0.0
        %802 = vmatpush1.xpose.msra.mxu0 0.0
        %803 = vmatprep.subr.mxu0 0.0
        %804 = vmatpush1.xpose.msra.mxu0 0.0
        %805 = vmatprep.subr.mxu0 0.0
        %806 = vmatpush1.xpose.msra.mxu0 0.0
        %807 = vmatprep.subr.mxu0 0.0
        %808 = vmatpush1.xpose.msra.mxu0 0.0
        %809 = vmatprep.subr.mxu0 0.0
        %810 = vmatpush1.xpose.msra.mxu0 0.0
        %811 = vmatprep.subr.mxu0 0.0
        %812 = vmatpush1.xpose.msra.mxu0 0.0
        %813 = vmatprep.subr.mxu0 0.0
        %814 = vmatpush1.xpose.msra.mxu0 0.0
        %815 = vmatprep.subr.mxu0 0.0
        %816 = vmatpush1.xpose.msra.mxu0 0.0
        %817 = vmatprep.subr.mxu0 0.0
        %818 = vmatpush1.xpose.msra.mxu0 0.0
        %819 = vmatprep.subr.mxu0 0.0
        %820 = vmatpush1.xpose.msra.mxu0 0.0
        %821 = vmatprep.subr.mxu0 0.0
        %822 = vmatpush1.xpose.msra.mxu0 0.0
        %823 = vmatprep.subr.mxu0 0.0
        %824 = vmatpush1.xpose.msra.mxu0 0.0
        %825 = vmatprep.subr.mxu0 0.0
        %826 = vmatpush1.xpose.msra.mxu0 0.0
        %827 = vmatprep.subr.mxu0 0.0
        %828 = vmatpush1.xpose.msra.mxu0 0.0
        %829 = vmatprep.subr.mxu0 0.0
        %830 = vmatpush1.xpose.msra.mxu0 0.0
        %831 = vmatprep.subr.mxu0 0.0
        %832 = vmatpush1.xpose.msra.mxu0 0.0
        %833 = vmatprep.subr.mxu0 0.0
        %834 = vmatpush1.xpose.msra.mxu0 0.0
        %835 = vmatprep.subr.mxu0 0.0
        %836 = vmatpush1.xpose.msra.mxu0 0.0
        %837 = vmatprep.subr.mxu0 0.0
        %838 = vmatpush1.xpose.msra.mxu0 0.0
        %839 = vmatprep.subr.mxu0 0.0
        %840 = vmatpush1.xpose.msra.mxu0 0.0
        %841 = vmatprep.subr.mxu0 0.0
        %842 = vmatpush1.xpose.msra.mxu0 0.0
        %843 = vmatprep.subr.mxu0 0.0
        %844 = vmatpush1.xpose.msra.mxu0 0.0
        %845 = vmatprep.subr.mxu0 0.0
        %846 = vmatpush1.xpose.msra.mxu0 0.0
        %847 = vmatprep.mubr.f32.mxu0 0.0
        %v848 = vand.u32 %v403, 4294901760
        %849 = vmatmul.mubr.f32.gmra.mrb[0].mxu0 %v848
        %v850 = vpop.f32.mrb[0].mxu0
        %v851 = vadd.f32 %v779, %v850
        %v852 = vpop.f32.mrb[0].mxu0
        %853 = vdwg.mxu0
        %v854 = vld [vmem:[#allocation9] sm:$0xff]
        %v855 = vld [vmem:[#allocation9 + $0x8] sm:$0xff]
        %v856 = vld [vmem:[#allocation9 + $0x10] sm:$0xff]
        %v857 = vld [vmem:[#allocation9 + $0x18] sm:$0xff]
        %v858 = vld [vmem:[%s4] sm:$0x1]
        %v860 = vlaneseq
        %v861 = vshrl.u32 %v860, 7
        %v862 = vsub.s32 0, %v861
        %v863 = vrot.slane %v858, %v862
        %865 = vmatprep.subr.mxu0 0.0
        %v866 = vand.u32 %v854, 4294901760
        %867 = vmatpush1.msra.mxu0 %v866
        %868 = vmatprep.subr.mxu0 0.0
        %v869 = vand.u32 %v855, 4294901760
        %870 = vmatpush1.msra.mxu0 %v869
        %871 = vmatprep.subr.mxu0 0.0
        %v872 = vand.u32 %v856, 4294901760
        %873 = vmatpush1.msra.mxu0 %v872
        %874 = vmatprep.subr.mxu0 0.0
        %v875 = vand.u32 %v857, 4294901760
        %876 = vmatpush1.msra.mxu0 %v875
        %877 = vmatprep.subr.mxu0 0.0
        %878 = vmatpush1.msra.mxu0 0.0
        %879 = vmatprep.subr.mxu0 0.0
        %880 = vmatpush1.msra.mxu0 0.0
        %881 = vmatprep.subr.mxu0 0.0
        %882 = vmatpush1.msra.mxu0 0.0
        %883 = vmatprep.subr.mxu0 0.0
        %884 = vmatpush1.msra.mxu0 0.0
        %885 = vmatprep.subr.mxu0 0.0
        %886 = vmatpush1.msra.mxu0 0.0
        %887 = vmatprep.subr.mxu0 0.0
        %888 = vmatpush1.msra.mxu0 0.0
        %889 = vmatprep.subr.mxu0 0.0
        %890 = vmatpush1.msra.mxu0 0.0
        %891 = vmatprep.subr.mxu0 0.0
        %892 = vmatpush1.msra.mxu0 0.0
        %893 = vmatprep.subr.mxu0 0.0
        %894 = vmatpush1.msra.mxu0 0.0
        %895 = vmatprep.subr.mxu0 0.0
        %896 = vmatpush1.msra.mxu0 0.0
        %897 = vmatprep.subr.mxu0 0.0
        %898 = vmatpush1.msra.mxu0 0.0
        %899 = vmatprep.subr.mxu0 0.0
        %900 = vmatpush1.msra.mxu0 0.0
        %901 = vmatprep.subr.mxu0 0.0
        %902 = vmatpush1.msra.mxu0 0.0
        %903 = vmatprep.subr.mxu0 0.0
        %904 = vmatpush1.msra.mxu0 0.0
        %905 = vmatprep.subr.mxu0 0.0
        %906 = vmatpush1.msra.mxu0 0.0
        %907 = vmatprep.subr.mxu0 0.0
        %908 = vmatpush1.msra.mxu0 0.0
        %909 = vmatprep.subr.mxu0 0.0
        %910 = vmatpush1.msra.mxu0 0.0
        %911 = vmatprep.subr.mxu0 0.0
        %912 = vmatpush1.msra.mxu0 0.0
        %913 = vmatprep.subr.mxu0 0.0
        %914 = vmatpush1.msra.mxu0 0.0
        %915 = vmatprep.subr.mxu0 0.0
        %916 = vmatpush1.msra.mxu0 0.0
        %917 = vmatprep.subr.mxu0 0.0
        %918 = vmatpush1.msra.mxu0 0.0
        %919 = vmatprep.subr.mxu0 0.0
        %920 = vmatpush1.msra.mxu0 0.0
        %921 = vmatprep.subr.mxu0 0.0
        %922 = vmatpush1.msra.mxu0 0.0
        %923 = vmatprep.subr.mxu0 0.0
        %924 = vmatpush1.msra.mxu0 0.0
        %925 = vmatprep.subr.mxu0 0.0
        %926 = vmatpush1.msra.mxu0 0.0
        %927 = vmatprep.subr.mxu0 0.0
        %928 = vmatpush1.msra.mxu0 0.0
        %929 = vmatprep.subr.mxu0 0.0
        %930 = vmatpush1.msra.mxu0 0.0
        %931 = vmatprep.subr.mxu0 0.0
        %932 = vmatpush1.msra.mxu0 0.0
        %933 = vmatprep.mubr.f32.mxu0 0.0
        %v934 = vand.u32 %v406, 4294901760
        %v935 = vsub.f32 %v406, %v934
        %v936 = vand.u32 %v935, 4294901760
        %v937 = vsub.f32 %v935, %v936
        %v938 = vand.u32 %v937, 4294901760
        %939 = vmatmul.mubr.f32.gmra.mrb[0].mxu0 %v938
        %v940 = vpop.f32.mrb[0].mxu0
        %v941 = vadd.f32 %v863, %v940
        %v942 = vpop.f32.mrb[0].mxu0
        %943 = vdwg.mxu0
        %944 = vmatprep.subr.mxu0 0.0
        %v945 = vand.u32 %v854, 4294901760
        %v946 = vsub.f32 %v854, %v945
        %v947 = vand.u32 %v946, 4294901760
        %v948 = vsub.f32 %v946, %v947
        %v949 = vand.u32 %v948, 4294901760
        %950 = vmatpush1.msra.mxu0 %v949
        %951 = vmatprep.subr.mxu0 0.0
        %v952 = vand.u32 %v855, 4294901760
        %v953 = vsub.f32 %v855, %v952
        %v954 = vand.u32 %v953, 4294901760
        %v955 = vsub.f32 %v953, %v954
        %v956 = vand.u32 %v955, 4294901760
        %957 = vmatpush1.msra.mxu0 %v956
        %958 = vmatprep.subr.mxu0 0.0
        %v959 = vand.u32 %v856, 4294901760
        %v960 = vsub.f32 %v856, %v959
        %v961 = vand.u32 %v960, 4294901760
        %v962 = vsub.f32 %v960, %v961
        %v963 = vand.u32 %v962, 4294901760
        %964 = vmatpush1.msra.mxu0 %v963
        %965 = vmatprep.subr.mxu0 0.0
        %v966 = vand.u32 %v857, 4294901760
        %v967 = vsub.f32 %v857, %v966
        %v968 = vand.u32 %v967, 4294901760
        %v969 = vsub.f32 %v967, %v968
        %v970 = vand.u32 %v969, 4294901760
        %971 = vmatpush1.msra.mxu0 %v970
        %972 = vmatprep.subr.mxu0 0.0
        %973 = vmatpush1.msra.mxu0 0.0
        %974 = vmatprep.subr.mxu0 0.0
        %975 = vmatpush1.msra.mxu0 0.0
        %976 = vmatprep.subr.mxu0 0.0
        %977 = vmatpush1.msra.mxu0 0.0
        %978 = vmatprep.subr.mxu0 0.0
        %979 = vmatpush1.msra.mxu0 0.0
        %980 = vmatprep.subr.mxu0 0.0
        %981 = vmatpush1.msra.mxu0 0.0
        %982 = vmatprep.subr.mxu0 0.0
        %983 = vmatpush1.msra.mxu0 0.0
        %984 = vmatprep.subr.mxu0 0.0
        %985 = vmatpush1.msra.mxu0 0.0
        %986 = vmatprep.subr.mxu0 0.0
        %987 = vmatpush1.msra.mxu0 0.0
        %988 = vmatprep.subr.mxu0 0.0
        %989 = vmatpush1.msra.mxu0 0.0
        %990 = vmatprep.subr.mxu0 0.0
        %991 = vmatpush1.msra.mxu0 0.0
        %992 = vmatprep.subr.mxu0 0.0
        %993 = vmatpush1.msra.mxu0 0.0
        %994 = vmatprep.subr.mxu0 0.0
        %995 = vmatpush1.msra.mxu0 0.0
        %996 = vmatprep.subr.mxu0 0.0
        %997 = vmatpush1.msra.mxu0 0.0
        %998 = vmatprep.subr.mxu0 0.0
        %999 = vmatpush1.msra.mxu0 0.0
        %1000 = vmatprep.subr.mxu0 0.0
        %1001 = vmatpush1.msra.mxu0 0.0
        %1002 = vmatprep.subr.mxu0 0.0
        %1003 = vmatpush1.msra.mxu0 0.0
        %1004 = vmatprep.subr.mxu0 0.0
        %1005 = vmatpush1.msra.mxu0 0.0
        %1006 = vmatprep.subr.mxu0 0.0
        %1007 = vmatpush1.msra.mxu0 0.0
        %1008 = vmatprep.subr.mxu0 0.0
        %1009 = vmatpush1.msra.mxu0 0.0
        %1010 = vmatprep.subr.mxu0 0.0
        %1011 = vmatpush1.msra.mxu0 0.0
        %1012 = vmatprep.subr.mxu0 0.0
        %1013 = vmatpush1.msra.mxu0 0.0
        %1014 = vmatprep.subr.mxu0 0.0
        %1015 = vmatpush1.msra.mxu0 0.0
        %1016 = vmatprep.subr.mxu0 0.0
        %1017 = vmatpush1.msra.mxu0 0.0
        %1018 = vmatprep.subr.mxu0 0.0
        %1019 = vmatpush1.msra.mxu0 0.0
        %1020 = vmatprep.subr.mxu0 0.0
        %1021 = vmatpush1.msra.mxu0 0.0
        %1022 = vmatprep.subr.mxu0 0.0
        %1023 = vmatpush1.msra.mxu0 0.0
        %1024 = vmatprep.subr.mxu0 0.0
        %1025 = vmatpush1.msra.mxu0 0.0
        %1026 = vmatprep.subr.mxu0 0.0
        %1027 = vmatpush1.msra.mxu0 0.0
        %1028 = vmatprep.mubr.f32.mxu0 0.0
        %v1029 = vand.u32 %v406, 4294901760
        %1030 = vmatmul.mubr.f32.gmra.mrb[0].mxu0 %v1029
        %v1031 = vpop.f32.mrb[0].mxu0
        %v1032 = vadd.f32 %v941, %v1031
        %v1033 = vpop.f32.mrb[0].mxu0
        %1034 = vdwg.mxu0
        %1035 = vmatprep.subr.mxu0 0.0
        %v1036 = vand.u32 %v854, 4294901760
        %v1037 = vsub.f32 %v854, %v1036
        %1038 = vmatpush1.msra.mxu0 %v1037
        %1039 = vmatprep.subr.mxu0 0.0
        %v1040 = vand.u32 %v855, 4294901760
        %v1041 = vsub.f32 %v855, %v1040
        %1042 = vmatpush1.msra.mxu0 %v1041
        %1043 = vmatprep.subr.mxu0 0.0
        %v1044 = vand.u32 %v856, 4294901760
        %v1045 = vsub.f32 %v856, %v1044
        %1046 = vmatpush1.msra.mxu0 %v1045
        %1047 = vmatprep.subr.mxu0 0.0
        %v1048 = vand.u32 %v857, 4294901760
        %v1049 = vsub.f32 %v857, %v1048
        %1050 = vmatpush1.msra.mxu0 %v1049
        %1051 = vmatprep.subr.mxu0 0.0
        %1052 = vmatpush1.msra.mxu0 0.0
        %1053 = vmatprep.subr.mxu0 0.0
        %1054 = vmatpush1.msra.mxu0 0.0
        %1055 = vmatprep.subr.mxu0 0.0
        %1056 = vmatpush1.msra.mxu0 0.0
        %1057 = vmatprep.subr.mxu0 0.0
        %1058 = vmatpush1.msra.mxu0 0.0
        %1059 = vmatprep.subr.mxu0 0.0
        %1060 = vmatpush1.msra.mxu0 0.0
        %1061 = vmatprep.subr.mxu0 0.0
        %1062 = vmatpush1.msra.mxu0 0.0
        %1063 = vmatprep.subr.mxu0 0.0
        %1064 = vmatpush1.msra.mxu0 0.0
        %1065 = vmatprep.subr.mxu0 0.0
        %1066 = vmatpush1.msra.mxu0 0.0
        %1067 = vmatprep.subr.mxu0 0.0
        %1068 = vmatpush1.msra.mxu0 0.0
        %1069 = vmatprep.subr.mxu0 0.0
        %1070 = vmatpush1.msra.mxu0 0.0
        %1071 = vmatprep.subr.mxu0 0.0
        %1072 = vmatpush1.msra.mxu0 0.0
        %1073 = vmatprep.subr.mxu0 0.0
        %1074 = vmatpush1.msra.mxu0 0.0
        %1075 = vmatprep.subr.mxu0 0.0
        %1076 = vmatpush1.msra.mxu0 0.0
        %1077 = vmatprep.subr.mxu0 0.0
        %1078 = vmatpush1.msra.mxu0 0.0
        %1079 = vmatprep.subr.mxu0 0.0
        %1080 = vmatpush1.msra.mxu0 0.0
        %1081 = vmatprep.subr.mxu0 0.0
        %1082 = vmatpush1.msra.mxu0 0.0
        %1083 = vmatprep.subr.mxu0 0.0
        %1084 = vmatpush1.msra.mxu0 0.0
        %1085 = vmatprep.subr.mxu0 0.0
        %1086 = vmatpush1.msra.mxu0 0.0
        %1087 = vmatprep.subr.mxu0 0.0
        %1088 = vmatpush1.msra.mxu0 0.0
        %1089 = vmatprep.subr.mxu0 0.0
        %1090 = vmatpush1.msra.mxu0 0.0
        %1091 = vmatprep.subr.mxu0 0.0
        %1092 = vmatpush1.msra.mxu0 0.0
        %1093 = vmatprep.subr.mxu0 0.0
        %1094 = vmatpush1.msra.mxu0 0.0
        %1095 = vmatprep.subr.mxu0 0.0
        %1096 = vmatpush1.msra.mxu0 0.0
        %1097 = vmatprep.subr.mxu0 0.0
        %1098 = vmatpush1.msra.mxu0 0.0
        %1099 = vmatprep.subr.mxu0 0.0
        %1100 = vmatpush1.msra.mxu0 0.0
        %1101 = vmatprep.subr.mxu0 0.0
        %1102 = vmatpush1.msra.mxu0 0.0
        %1103 = vmatprep.subr.mxu0 0.0
        %1104 = vmatpush1.msra.mxu0 0.0
        %1105 = vmatprep.subr.mxu0 0.0
        %1106 = vmatpush1.msra.mxu0 0.0
        %1107 = vmatprep.mubr.f32.mxu0 0.0
        %v1108 = vand.u32 %v406, 4294901760
        %v1109 = vsub.f32 %v406, %v1108
        %1110 = vmatmul.mubr.f32.gmra.mrb[0].mxu0 %v1109
        %v1111 = vpop.f32.mrb[0].mxu0
        %v1112 = vadd.f32 %v1032, %v1111
        %v1113 = vpop.f32.mrb[0].mxu0
        %1114 = vdwg.mxu0
        %1115 = vmatprep.subr.mxu0 0.0
        %v1116 = vand.u32 %v854, 4294901760
        %1117 = vmatpush1.msra.mxu0 %v1116
        %1118 = vmatprep.subr.mxu0 0.0
        %v1119 = vand.u32 %v855, 4294901760
        %1120 = vmatpush1.msra.mxu0 %v1119
        %1121 = vmatprep.subr.mxu0 0.0
        %v1122 = vand.u32 %v856, 4294901760
        %1123 = vmatpush1.msra.mxu0 %v1122
        %1124 = vmatprep.subr.mxu0 0.0
        %v1125 = vand.u32 %v857, 4294901760
        %1126 = vmatpush1.msra.mxu0 %v1125
        %1127 = vmatprep.subr.mxu0 0.0
        %1128 = vmatpush1.msra.mxu0 0.0
        %1129 = vmatprep.subr.mxu0 0.0
        %1130 = vmatpush1.msra.mxu0 0.0
        %1131 = vmatprep.subr.mxu0 0.0
        %1132 = vmatpush1.msra.mxu0 0.0
        %1133 = vmatprep.subr.mxu0 0.0
        %1134 = vmatpush1.msra.mxu0 0.0
        %1135 = vmatprep.subr.mxu0 0.0
        %1136 = vmatpush1.msra.mxu0 0.0
        %1137 = vmatprep.subr.mxu0 0.0
        %1138 = vmatpush1.msra.mxu0 0.0
        %1139 = vmatprep.subr.mxu0 0.0
        %1140 = vmatpush1.msra.mxu0 0.0
        %1141 = vmatprep.subr.mxu0 0.0
        %1142 = vmatpush1.msra.mxu0 0.0
        %1143 = vmatprep.subr.mxu0 0.0
        %1144 = vmatpush1.msra.mxu0 0.0
        %1145 = vmatprep.subr.mxu0 0.0
        %1146 = vmatpush1.msra.mxu0 0.0
        %1147 = vmatprep.subr.mxu0 0.0
        %1148 = vmatpush1.msra.mxu0 0.0
        %1149 = vmatprep.subr.mxu0 0.0
        %1150 = vmatpush1.msra.mxu0 0.0
        %1151 = vmatprep.subr.mxu0 0.0
        %1152 = vmatpush1.msra.mxu0 0.0
        %1153 = vmatprep.subr.mxu0 0.0
        %1154 = vmatpush1.msra.mxu0 0.0
        %1155 = vmatprep.subr.mxu0 0.0
        %1156 = vmatpush1.msra.mxu0 0.0
        %1157 = vmatprep.subr.mxu0 0.0
        %1158 = vmatpush1.msra.mxu0 0.0
        %1159 = vmatprep.subr.mxu0 0.0
        %1160 = vmatpush1.msra.mxu0 0.0
        %1161 = vmatprep.subr.mxu0 0.0
        %1162 = vmatpush1.msra.mxu0 0.0
        %1163 = vmatprep.subr.mxu0 0.0
        %1164 = vmatpush1.msra.mxu0 0.0
        %1165 = vmatprep.subr.mxu0 0.0
        %1166 = vmatpush1.msra.mxu0 0.0
        %1167 = vmatprep.subr.mxu0 0.0
        %1168 = vmatpush1.msra.mxu0 0.0
        %1169 = vmatprep.subr.mxu0 0.0
        %1170 = vmatpush1.msra.mxu0 0.0
        %1171 = vmatprep.subr.mxu0 0.0
        %1172 = vmatpush1.msra.mxu0 0.0
        %1173 = vmatprep.subr.mxu0 0.0
        %1174 = vmatpush1.msra.mxu0 0.0
        %1175 = vmatprep.subr.mxu0 0.0
        %1176 = vmatpush1.msra.mxu0 0.0
        %1177 = vmatprep.subr.mxu0 0.0
        %1178 = vmatpush1.msra.mxu0 0.0
        %1179 = vmatprep.subr.mxu0 0.0
        %1180 = vmatpush1.msra.mxu0 0.0
        %1181 = vmatprep.subr.mxu0 0.0
        %1182 = vmatpush1.msra.mxu0 0.0
        %1183 = vmatprep.mubr.f32.mxu0 0.0
        %v1184 = vand.u32 %v406, 4294901760
        %v1185 = vsub.f32 %v406, %v1184
        %v1186 = vand.u32 %v1185, 4294901760
        %1187 = vmatmul.mubr.f32.gmra.mrb[0].mxu0 %v1186
        %v1188 = vpop.f32.mrb[0].mxu0
        %v1189 = vadd.f32 %v1112, %v1188
        %v1190 = vpop.f32.mrb[0].mxu0
        %1191 = vdwg.mxu0
        %1192 = vmatprep.subr.mxu0 0.0
        %v1193 = vand.u32 %v854, 4294901760
        %v1194 = vsub.f32 %v854, %v1193
        %v1195 = vand.u32 %v1194, 4294901760
        %1196 = vmatpush1.msra.mxu0 %v1195
        %1197 = vmatprep.subr.mxu0 0.0
        %v1198 = vand.u32 %v855, 4294901760
        %v1199 = vsub.f32 %v855, %v1198
        %v1200 = vand.u32 %v1199, 4294901760
        %1201 = vmatpush1.msra.mxu0 %v1200
        %1202 = vmatprep.subr.mxu0 0.0
        %v1203 = vand.u32 %v856, 4294901760
        %v1204 = vsub.f32 %v856, %v1203
        %v1205 = vand.u32 %v1204, 4294901760
        %1206 = vmatpush1.msra.mxu0 %v1205
        %1207 = vmatprep.subr.mxu0 0.0
        %v1208 = vand.u32 %v857, 4294901760
        %v1209 = vsub.f32 %v857, %v1208
        %v1210 = vand.u32 %v1209, 4294901760
        %1211 = vmatpush1.msra.mxu0 %v1210
        %1212 = vmatprep.subr.mxu0 0.0
        %1213 = vmatpush1.msra.mxu0 0.0
        %1214 = vmatprep.subr.mxu0 0.0
        %1215 = vmatpush1.msra.mxu0 0.0
        %1216 = vmatprep.subr.mxu0 0.0
        %1217 = vmatpush1.msra.mxu0 0.0
        %1218 = vmatprep.subr.mxu0 0.0
        %1219 = vmatpush1.msra.mxu0 0.0
        %1220 = vmatprep.subr.mxu0 0.0
        %1221 = vmatpush1.msra.mxu0 0.0
        %1222 = vmatprep.subr.mxu0 0.0
        %1223 = vmatpush1.msra.mxu0 0.0
        %1224 = vmatprep.subr.mxu0 0.0
        %1225 = vmatpush1.msra.mxu0 0.0
        %1226 = vmatprep.subr.mxu0 0.0
        %1227 = vmatpush1.msra.mxu0 0.0
        %1228 = vmatprep.subr.mxu0 0.0
        %1229 = vmatpush1.msra.mxu0 0.0
        %1230 = vmatprep.subr.mxu0 0.0
        %1231 = vmatpush1.msra.mxu0 0.0
        %1232 = vmatprep.subr.mxu0 0.0
        %1233 = vmatpush1.msra.mxu0 0.0
        %1234 = vmatprep.subr.mxu0 0.0
        %1235 = vmatpush1.msra.mxu0 0.0
        %1236 = vmatprep.subr.mxu0 0.0
        %1237 = vmatpush1.msra.mxu0 0.0
        %1238 = vmatprep.subr.mxu0 0.0
        %1239 = vmatpush1.msra.mxu0 0.0
        %1240 = vmatprep.subr.mxu0 0.0
        %1241 = vmatpush1.msra.mxu0 0.0
        %1242 = vmatprep.subr.mxu0 0.0
        %1243 = vmatpush1.msra.mxu0 0.0
        %1244 = vmatprep.subr.mxu0 0.0
        %1245 = vmatpush1.msra.mxu0 0.0
        %1246 = vmatprep.subr.mxu0 0.0
        %1247 = vmatpush1.msra.mxu0 0.0
        %1248 = vmatprep.subr.mxu0 0.0
        %1249 = vmatpush1.msra.mxu0 0.0
        %1250 = vmatprep.subr.mxu0 0.0
        %1251 = vmatpush1.msra.mxu0 0.0
        %1252 = vmatprep.subr.mxu0 0.0
        %1253 = vmatpush1.msra.mxu0 0.0
        %1254 = vmatprep.subr.mxu0 0.0
        %1255 = vmatpush1.msra.mxu0 0.0
        %1256 = vmatprep.subr.mxu0 0.0
        %1257 = vmatpush1.msra.mxu0 0.0
        %1258 = vmatprep.subr.mxu0 0.0
        %1259 = vmatpush1.msra.mxu0 0.0
        %1260 = vmatprep.subr.mxu0 0.0
        %1261 = vmatpush1.msra.mxu0 0.0
        %1262 = vmatprep.subr.mxu0 0.0
        %1263 = vmatpush1.msra.mxu0 0.0
        %1264 = vmatprep.subr.mxu0 0.0
        %1265 = vmatpush1.msra.mxu0 0.0
        %1266 = vmatprep.subr.mxu0 0.0
        %1267 = vmatpush1.msra.mxu0 0.0
        %1268 = vmatprep.mubr.f32.mxu0 0.0
        %v1269 = vand.u32 %v406, 4294901760
        %1270 = vmatmul.mubr.f32.gmra.mrb[0].mxu0 %v1269
        %v1271 = vpop.f32.mrb[0].mxu0
        %v1272 = vadd.f32 %v1189, %v1271
        %v1273 = vpop.f32.mrb[0].mxu0
        %1274 = vdwg.mxu0
        %1275 = vmatprep.subr.mxu0 0.0
        %v1276 = vand.u32 %v854, 4294901760
        %1277 = vmatpush1.msra.mxu0 %v1276
        %1278 = vmatprep.subr.mxu0 0.0
        %v1279 = vand.u32 %v855, 4294901760
        %1280 = vmatpush1.msra.mxu0 %v1279
        %1281 = vmatprep.subr.mxu0 0.0
        %v1282 = vand.u32 %v856, 4294901760
        %1283 = vmatpush1.msra.mxu0 %v1282
        %1284 = vmatprep.subr.mxu0 0.0
        %v1285 = vand.u32 %v857, 4294901760
        %1286 = vmatpush1.msra.mxu0 %v1285
        %1287 = vmatprep.subr.mxu0 0.0
        %1288 = vmatpush1.msra.mxu0 0.0
        %1289 = vmatprep.subr.mxu0 0.0
        %1290 = vmatpush1.msra.mxu0 0.0
        %1291 = vmatprep.subr.mxu0 0.0
        %1292 = vmatpush1.msra.mxu0 0.0
        %1293 = vmatprep.subr.mxu0 0.0
        %1294 = vmatpush1.msra.mxu0 0.0
        %1295 = vmatprep.subr.mxu0 0.0
        %1296 = vmatpush1.msra.mxu0 0.0
        %1297 = vmatprep.subr.mxu0 0.0
        %1298 = vmatpush1.msra.mxu0 0.0
        %1299 = vmatprep.subr.mxu0 0.0
        %1300 = vmatpush1.msra.mxu0 0.0
        %1301 = vmatprep.subr.mxu0 0.0
        %1302 = vmatpush1.msra.mxu0 0.0
        %1303 = vmatprep.subr.mxu0 0.0
        %1304 = vmatpush1.msra.mxu0 0.0
        %1305 = vmatprep.subr.mxu0 0.0
        %1306 = vmatpush1.msra.mxu0 0.0
        %1307 = vmatprep.subr.mxu0 0.0
        %1308 = vmatpush1.msra.mxu0 0.0
        %1309 = vmatprep.subr.mxu0 0.0
        %1310 = vmatpush1.msra.mxu0 0.0
        %1311 = vmatprep.subr.mxu0 0.0
        %1312 = vmatpush1.msra.mxu0 0.0
        %1313 = vmatprep.subr.mxu0 0.0
        %1314 = vmatpush1.msra.mxu0 0.0
        %1315 = vmatprep.subr.mxu0 0.0
        %1316 = vmatpush1.msra.mxu0 0.0
        %1317 = vmatprep.subr.mxu0 0.0
        %1318 = vmatpush1.msra.mxu0 0.0
        %1319 = vmatprep.subr.mxu0 0.0
        %1320 = vmatpush1.msra.mxu0 0.0
        %1321 = vmatprep.subr.mxu0 0.0
        %1322 = vmatpush1.msra.mxu0 0.0
        %1323 = vmatprep.subr.mxu0 0.0
        %1324 = vmatpush1.msra.mxu0 0.0
        %1325 = vmatprep.subr.mxu0 0.0
        %1326 = vmatpush1.msra.mxu0 0.0
        %1327 = vmatprep.subr.mxu0 0.0
        %1328 = vmatpush1.msra.mxu0 0.0
        %1329 = vmatprep.subr.mxu0 0.0
        %1330 = vmatpush1.msra.mxu0 0.0
        %1331 = vmatprep.subr.mxu0 0.0
        %1332 = vmatpush1.msra.mxu0 0.0
        %1333 = vmatprep.subr.mxu0 0.0
        %1334 = vmatpush1.msra.mxu0 0.0
        %1335 = vmatprep.subr.mxu0 0.0
        %1336 = vmatpush1.msra.mxu0 0.0
        %1337 = vmatprep.subr.mxu0 0.0
        %1338 = vmatpush1.msra.mxu0 0.0
        %1339 = vmatprep.subr.mxu0 0.0
        %1340 = vmatpush1.msra.mxu0 0.0
        %1341 = vmatprep.subr.mxu0 0.0
        %1342 = vmatpush1.msra.mxu0 0.0
        %1343 = vmatprep.mubr.f32.mxu0 0.0
        %v1344 = vand.u32 %v406, 4294901760
        %1345 = vmatmul.mubr.f32.gmra.mrb[0].mxu0 %v1344
        %v1346 = vpop.f32.mrb[0].mxu0
        %v1347 = vadd.f32 %v1272, %v1346
        %v1348 = vpop.f32.mrb[0].mxu0
        %1349 = vdwg.mxu0
        %v1350 = vld [vmem:[#allocation2] sm:$0x1]
        %vm1351 = vcmask 57344
        %v1352 = vsel %vm1351, %v851, -inf
        %1353 = vmax.xlane.f32.xlu0 %v1352
        %v1354 = vpop.xlane.xlu0 %1353
        %v1355 = vmax.f32 %v1350, %v1354
        %v1356 = vsub.f32 %v1350, %v1355
        %v1357 = vmul.f32 %v1356, 1.442695
        %v1358 = vpow.pop %v1357
        %1360 = vset.pattern.permute.xlu0 0
        %1361 = vperm.xlu0 %1360, %v1355
        %v1362 = vpop.permute.xlu0 %1361
        %v1364 = vlaneseq
        %v1365 = vshrl.u32 %v1364, 7
        %v1366 = vsub.s32 0, %v1365
        %v1367 = vrot.slane %v1362, %v1366
        %v1368 = vsub.f32 %v851, %v1367
        %v1369 = vmul.f32 %v1368, 1.442695
        %v1370 = vpow.pop %v1369
        %v1371 = vld [vmem:[#allocation3] sm:$0x1]
        %v1372 = vmul.f32 %v1358, %v1371
        %v1373 = vsel %vm1351, %v1370, 0.0
        %1374 = vadd.xlane.f32.xlu0 %v1373
        %v1375 = vpop.xlane.xlu0 %1374
        %v1376 = vadd.f32 %v1372, %v1375
        %vm1377 = vcmask 0
        %1378 = vst.msk [vmem:[#allocation3] sm:$0x1] %vm1377, %v1376
        %v1379 = vld [vmem:[#allocation4] sm:$0x1]
        %1381 = vset.pattern.permute.xlu0 0
        %1382 = vperm.xlu0 %1381, %v1358
        %v1383 = vpop.permute.xlu0 %1382
        %v1385 = vlaneseq
        %v1386 = vshrl.u32 %v1385, 7
        %v1387 = vsub.s32 0, %v1386
        %v1388 = vrot.slane %v1383, %v1387
        %v1389 = vmul.f32 %v1388, %v1379
        %vm1390 = vcmask 64512
        %v1392 = vsel %vm1390, %v1370, 0
        %1394 = vmatprep.subr.mxu0 0.0
        %v1395 = vand.u32 %v1347, 4294901760
        %1396 = vmatpush1.msra.mxu0 %v1395
        %1397 = vmatprep.subr.mxu0 0.0
        %1398 = vmatpush1.msra.mxu0 0.0
        %1399 = vmatprep.subr.mxu0 0.0
        %1400 = vmatpush1.msra.mxu0 0.0
        %1401 = vmatprep.subr.mxu0 0.0
        %1402 = vmatpush1.msra.mxu0 0.0
        %1403 = vmatprep.subr.mxu0 0.0
        %1404 = vmatpush1.msra.mxu0 0.0
        %1405 = vmatprep.subr.mxu0 0.0
        %1406 = vmatpush1.msra.mxu0 0.0
        %1407 = vmatprep.subr.mxu0 0.0
        %1408 = vmatpush1.msra.mxu0 0.0
        %1409 = vmatprep.subr.mxu0 0.0
        %1410 = vmatpush1.msra.mxu0 0.0
        %1411 = vmatprep.subr.mxu0 0.0
        %1412 = vmatpush1.msra.mxu0 0.0
        %1413 = vmatprep.subr.mxu0 0.0
        %1414 = vmatpush1.msra.mxu0 0.0
        %1415 = vmatprep.subr.mxu0 0.0
        %1416 = vmatpush1.msra.mxu0 0.0
        %1417 = vmatprep.subr.mxu0 0.0
        %1418 = vmatpush1.msra.mxu0 0.0
        %1419 = vmatprep.subr.mxu0 0.0
        %1420 = vmatpush1.msra.mxu0 0.0
        %1421 = vmatprep.subr.mxu0 0.0
        %1422 = vmatpush1.msra.mxu0 0.0
        %1423 = vmatprep.subr.mxu0 0.0
        %1424 = vmatpush1.msra.mxu0 0.0
        %1425 = vmatprep.subr.mxu0 0.0
        %1426 = vmatpush1.msra.mxu0 0.0
        %1427 = vmatprep.subr.mxu0 0.0
        %1428 = vmatpush1.msra.mxu0 0.0
        %1429 = vmatprep.subr.mxu0 0.0
        %1430 = vmatpush1.msra.mxu0 0.0
        %1431 = vmatprep.subr.mxu0 0.0
        %1432 = vmatpush1.msra.mxu0 0.0
        %1433 = vmatprep.subr.mxu0 0.0
        %1434 = vmatpush1.msra.mxu0 0.0
        %1435 = vmatprep.subr.mxu0 0.0
        %1436 = vmatpush1.msra.mxu0 0.0
        %1437 = vmatprep.subr.mxu0 0.0
        %1438 = vmatpush1.msra.mxu0 0.0
        %1439 = vmatprep.subr.mxu0 0.0
        %1440 = vmatpush1.msra.mxu0 0.0
        %1441 = vmatprep.subr.mxu0 0.0
        %1442 = vmatpush1.msra.mxu0 0.0
        %1443 = vmatprep.subr.mxu0 0.0
        %1444 = vmatpush1.msra.mxu0 0.0
        %1445 = vmatprep.subr.mxu0 0.0
        %1446 = vmatpush1.msra.mxu0 0.0
        %1447 = vmatprep.subr.mxu0 0.0
        %1448 = vmatpush1.msra.mxu0 0.0
        %1449 = vmatprep.subr.mxu0 0.0
        %1450 = vmatpush1.msra.mxu0 0.0
        %1451 = vmatprep.subr.mxu0 0.0
        %1452 = vmatpush1.msra.mxu0 0.0
        %1453 = vmatprep.subr.mxu0 0.0
        %1454 = vmatpush1.msra.mxu0 0.0
        %1455 = vmatprep.subr.mxu0 0.0
        %1456 = vmatpush1.msra.mxu0 0.0
        %1457 = vmatprep.subr.mxu0 0.0
        %1458 = vmatpush1.msra.mxu0 0.0
        %1459 = vmatprep.mubr.f32.mxu0 0.0
        %v1460 = vand.u32 %v1392, 4294901760
        %v1461 = vsub.f32 %v1392, %v1460
        %v1462 = vand.u32 %v1461, 4294901760
        %v1463 = vsub.f32 %v1461, %v1462
        %v1464 = vand.u32 %v1463, 4294901760
        %1465 = vmatmul.mubr.f32.gmra.mrb[0].mxu0 %v1464
        %v1466 = vpop.f32.mrb[0].mxu0
        %v1467 = vadd.f32 0.0, %v1466
        %v1468 = vpop.f32.mrb[0].mxu0
        %1469 = vdwg.mxu0
        %1470 = vmatprep.subr.mxu0 0.0
        %v1471 = vand.u32 %v1347, 4294901760
        %v1472 = vsub.f32 %v1347, %v1471
        %v1473 = vand.u32 %v1472, 4294901760
        %v1474 = vsub.f32 %v1472, %v1473
        %v1475 = vand.u32 %v1474, 4294901760
        %1476 = vmatpush1.msra.mxu0 %v1475
        %1477 = vmatprep.subr.mxu0 0.0
        %1478 = vmatpush1.msra.mxu0 0.0
        %1479 = vmatprep.subr.mxu0 0.0
        %1480 = vmatpush1.msra.mxu0 0.0
        %1481 = vmatprep.subr.mxu0 0.0
        %1482 = vmatpush1.msra.mxu0 0.0
        %1483 = vmatprep.subr.mxu0 0.0
        %1484 = vmatpush1.msra.mxu0 0.0
        %1485 = vmatprep.subr.mxu0 0.0
        %1486 = vmatpush1.msra.mxu0 0.0
        %1487 = vmatprep.subr.mxu0 0.0
        %1488 = vmatpush1.msra.mxu0 0.0
        %1489 = vmatprep.subr.mxu0 0.0
        %1490 = vmatpush1.msra.mxu0 0.0
        %1491 = vmatprep.subr.mxu0 0.0
        %1492 = vmatpush1.msra.mxu0 0.0
        %1493 = vmatprep.subr.mxu0 0.0
        %1494 = vmatpush1.msra.mxu0 0.0
        %1495 = vmatprep.subr.mxu0 0.0
        %1496 = vmatpush1.msra.mxu0 0.0
        %1497 = vmatprep.subr.mxu0 0.0
        %1498 = vmatpush1.msra.mxu0 0.0
        %1499 = vmatprep.subr.mxu0 0.0
        %1500 = vmatpush1.msra.mxu0 0.0
        %1501 = vmatprep.subr.mxu0 0.0
        %1502 = vmatpush1.msra.mxu0 0.0
        %1503 = vmatprep.subr.mxu0 0.0
        %1504 = vmatpush1.msra.mxu0 0.0
        %1505 = vmatprep.subr.mxu0 0.0
        %1506 = vmatpush1.msra.mxu0 0.0
        %1507 = vmatprep.subr.mxu0 0.0
        %1508 = vmatpush1.msra.mxu0 0.0
        %1509 = vmatprep.subr.mxu0 0.0
        %1510 = vmatpush1.msra.mxu0 0.0
        %1511 = vmatprep.subr.mxu0 0.0
        %1512 = vmatpush1.msra.mxu0 0.0
        %1513 = vmatprep.subr.mxu0 0.0
        %1514 = vmatpush1.msra.mxu0 0.0
        %1515 = vmatprep.subr.mxu0 0.0
        %1516 = vmatpush1.msra.mxu0 0.0
        %1517 = vmatprep.subr.mxu0 0.0
        %1518 = vmatpush1.msra.mxu0 0.0
        %1519 = vmatprep.subr.mxu0 0.0
        %1520 = vmatpush1.msra.mxu0 0.0
        %1521 = vmatprep.subr.mxu0 0.0
        %1522 = vmatpush1.msra.mxu0 0.0
        %1523 = vmatprep.subr.mxu0 0.0
        %1524 = vmatpush1.msra.mxu0 0.0
        %1525 = vmatprep.subr.mxu0 0.0
        %1526 = vmatpush1.msra.mxu0 0.0
        %1527 = vmatprep.subr.mxu0 0.0
        %1528 = vmatpush1.msra.mxu0 0.0
        %1529 = vmatprep.subr.mxu0 0.0
        %1530 = vmatpush1.msra.mxu0 0.0
        %1531 = vmatprep.subr.mxu0 0.0
        %1532 = vmatpush1.msra.mxu0 0.0
        %1533 = vmatprep.subr.mxu0 0.0
        %1534 = vmatpush1.msra.mxu0 0.0
        %1535 = vmatprep.subr.mxu0 0.0
        %1536 = vmatpush1.msra.mxu0 0.0
        %1537 = vmatprep.subr.mxu0 0.0
        %1538 = vmatpush1.msra.mxu0 0.0
        %1539 = vmatprep.mubr.f32.mxu0 0.0
        %v1540 = vand.u32 %v1392, 4294901760
        %1541 = vmatmul.mubr.f32.gmra.mrb[0].mxu0 %v1540
        %v1542 = vpop.f32.mrb[0].mxu0
        %v1543 = vadd.f32 %v1467, %v1542
        %v1544 = vpop.f32.mrb[0].mxu0
        %1545 = vdwg.mxu0
        %1546 = vmatprep.subr.mxu0 0.0
        %v1547 = vand.u32 %v1347, 4294901760
        %v1548 = vsub.f32 %v1347, %v1547
        %1549 = vmatpush1.msra.mxu0 %v1548
        %1550 = vmatprep.subr.mxu0 0.0
        %1551 = vmatpush1.msra.mxu0 0.0
        %1552 = vmatprep.subr.mxu0 0.0
        %1553 = vmatpush1.msra.mxu0 0.0
        %1554 = vmatprep.subr.mxu0 0.0
        %1555 = vmatpush1.msra.mxu0 0.0
        %1556 = vmatprep.subr.mxu0 0.0
        %1557 = vmatpush1.msra.mxu0 0.0
        %1558 = vmatprep.subr.mxu0 0.0
        %1559 = vmatpush1.msra.mxu0 0.0
        %1560 = vmatprep.subr.mxu0 0.0
        %1561 = vmatpush1.msra.mxu0 0.0
        %1562 = vmatprep.subr.mxu0 0.0
        %1563 = vmatpush1.msra.mxu0 0.0
        %1564 = vmatprep.subr.mxu0 0.0
        %1565 = vmatpush1.msra.mxu0 0.0
        %1566 = vmatprep.subr.mxu0 0.0
        %1567 = vmatpush1.msra.mxu0 0.0
        %1568 = vmatprep.subr.mxu0 0.0
        %1569 = vmatpush1.msra.mxu0 0.0
        %1570 = vmatprep.subr.mxu0 0.0
        %1571 = vmatpush1.msra.mxu0 0.0
        %1572 = vmatprep.subr.mxu0 0.0
        %1573 = vmatpush1.msra.mxu0 0.0
        %1574 = vmatprep.subr.mxu0 0.0
        %1575 = vmatpush1.msra.mxu0 0.0
        %1576 = vmatprep.subr.mxu0 0.0
        %1577 = vmatpush1.msra.mxu0 0.0
        %1578 = vmatprep.subr.mxu0 0.0
        %1579 = vmatpush1.msra.mxu0 0.0
        %1580 = vmatprep.subr.mxu0 0.0
        %1581 = vmatpush1.msra.mxu0 0.0
        %1582 = vmatprep.subr.mxu0 0.0
        %1583 = vmatpush1.msra.mxu0 0.0
        %1584 = vmatprep.subr.mxu0 0.0
        %1585 = vmatpush1.msra.mxu0 0.0
        %1586 = vmatprep.subr.mxu0 0.0
        %1587 = vmatpush1.msra.mxu0 0.0
        %1588 = vmatprep.subr.mxu0 0.0
        %1589 = vmatpush1.msra.mxu0 0.0
        %1590 = vmatprep.subr.mxu0 0.0
        %1591 = vmatpush1.msra.mxu0 0.0
        %1592 = vmatprep.subr.mxu0 0.0
        %1593 = vmatpush1.msra.mxu0 0.0
        %1594 = vmatprep.subr.mxu0 0.0
        %1595 = vmatpush1.msra.mxu0 0.0
        %1596 = vmatprep.subr.mxu0 0.0
        %1597 = vmatpush1.msra.mxu0 0.0
        %1598 = vmatprep.subr.mxu0 0.0
        %1599 = vmatpush1.msra.mxu0 0.0
        %1600 = vmatprep.subr.mxu0 0.0
        %1601 = vmatpush1.msra.mxu0 0.0
        %1602 = vmatprep.subr.mxu0 0.0
        %1603 = vmatpush1.msra.mxu0 0.0
        %1604 = vmatprep.subr.mxu0 0.0
        %1605 = vmatpush1.msra.mxu0 0.0
        %1606 = vmatprep.subr.mxu0 0.0
        %1607 = vmatpush1.msra.mxu0 0.0
        %1608 = vmatprep.subr.mxu0 0.0
        %1609 = vmatpush1.msra.mxu0 0.0
        %1610 = vmatprep.subr.mxu0 0.0
        %1611 = vmatpush1.msra.mxu0 0.0
        %1612 = vmatprep.mubr.f32.mxu0 0.0
        %v1613 = vand.u32 %v1392, 4294901760
        %v1614 = vsub.f32 %v1392, %v1613
        %1615 = vmatmul.mubr.f32.gmra.mrb[0].mxu0 %v1614
        %v1616 = vpop.f32.mrb[0].mxu0
        %v1617 = vadd.f32 %v1543, %v1616
        %v1618 = vpop.f32.mrb[0].mxu0
        %1619 = vdwg.mxu0
        %1620 = vmatprep.subr.mxu0 0.0
        %v1621 = vand.u32 %v1347, 4294901760
        %1622 = vmatpush1.msra.mxu0 %v1621
        %1623 = vmatprep.subr.mxu0 0.0
        %1624 = vmatpush1.msra.mxu0 0.0
        %1625 = vmatprep.subr.mxu0 0.0
        %1626 = vmatpush1.msra.mxu0 0.0
        %1627 = vmatprep.subr.mxu0 0.0
        %1628 = vmatpush1.msra.mxu0 0.0
        %1629 = vmatprep.subr.mxu0 0.0
        %1630 = vmatpush1.msra.mxu0 0.0
        %1631 = vmatprep.subr.mxu0 0.0
        %1632 = vmatpush1.msra.mxu0 0.0
        %1633 = vmatprep.subr.mxu0 0.0
        %1634 = vmatpush1.msra.mxu0 0.0
        %1635 = vmatprep.subr.mxu0 0.0
        %1636 = vmatpush1.msra.mxu0 0.0
        %1637 = vmatprep.subr.mxu0 0.0
        %1638 = vmatpush1.msra.mxu0 0.0
        %1639 = vmatprep.subr.mxu0 0.0
        %1640 = vmatpush1.msra.mxu0 0.0
        %1641 = vmatprep.subr.mxu0 0.0
        %1642 = vmatpush1.msra.mxu0 0.0
        %1643 = vmatprep.subr.mxu0 0.0
        %1644 = vmatpush1.msra.mxu0 0.0
        %1645 = vmatprep.subr.mxu0 0.0
        %1646 = vmatpush1.msra.mxu0 0.0
        %1647 = vmatprep.subr.mxu0 0.0
        %1648 = vmatpush1.msra.mxu0 0.0
        %1649 = vmatprep.subr.mxu0 0.0
        %1650 = vmatpush1.msra.mxu0 0.0
        %1651 = vmatprep.subr.mxu0 0.0
        %1652 = vmatpush1.msra.mxu0 0.0
        %1653 = vmatprep.subr.mxu0 0.0
        %1654 = vmatpush1.msra.mxu0 0.0
        %1655 = vmatprep.subr.mxu0 0.0
        %1656 = vmatpush1.msra.mxu0 0.0
        %1657 = vmatprep.subr.mxu0 0.0
        %1658 = vmatpush1.msra.mxu0 0.0
        %1659 = vmatprep.subr.mxu0 0.0
        %1660 = vmatpush1.msra.mxu0 0.0
        %1661 = vmatprep.subr.mxu0 0.0
        %1662 = vmatpush1.msra.mxu0 0.0
        %1663 = vmatprep.subr.mxu0 0.0
        %1664 = vmatpush1.msra.mxu0 0.0
        %1665 = vmatprep.subr.mxu0 0.0
        %1666 = vmatpush1.msra.mxu0 0.0
        %1667 = vmatprep.subr.mxu0 0.0
        %1668 = vmatpush1.msra.mxu0 0.0
        %1669 = vmatprep.subr.mxu0 0.0
        %1670 = vmatpush1.msra.mxu0 0.0
        %1671 = vmatprep.subr.mxu0 0.0
        %1672 = vmatpush1.msra.mxu0 0.0
        %1673 = vmatprep.subr.mxu0 0.0
        %1674 = vmatpush1.msra.mxu0 0.0
        %1675 = vmatprep.subr.mxu0 0.0
        %1676 = vmatpush1.msra.mxu0 0.0
        %1677 = vmatprep.subr.mxu0 0.0
        %1678 = vmatpush1.msra.mxu0 0.0
        %1679 = vmatprep.subr.mxu0 0.0
        %1680 = vmatpush1.msra.mxu0 0.0
        %1681 = vmatprep.subr.mxu0 0.0
        %1682 = vmatpush1.msra.mxu0 0.0
        %1683 = vmatprep.subr.mxu0 0.0
        %1684 = vmatpush1.msra.mxu0 0.0
        %1685 = vmatprep.mubr.f32.mxu0 0.0
        %v1686 = vand.u32 %v1392, 4294901760
        %v1687 = vsub.f32 %v1392, %v1686
        %v1688 = vand.u32 %v1687, 4294901760
        %1689 = vmatmul.mubr.f32.gmra.mrb[0].mxu0 %v1688
        %v1690 = vpop.f32.mrb[0].mxu0
        %v1691 = vadd.f32 %v1617, %v1690
        %v1692 = vpop.f32.mrb[0].mxu0
        %1693 = vdwg.mxu0
        %1694 = vmatprep.subr.mxu0 0.0
        %v1695 = vand.u32 %v1347, 4294901760
        %v1696 = vsub.f32 %v1347, %v1695
        %v1697 = vand.u32 %v1696, 4294901760
        %1698 = vmatpush1.msra.mxu0 %v1697
        %1699 = vmatprep.subr.mxu0 0.0
        %1700 = vmatpush1.msra.mxu0 0.0
        %1701 = vmatprep.subr.mxu0 0.0
        %1702 = vmatpush1.msra.mxu0 0.0
        %1703 = vmatprep.subr.mxu0 0.0
        %1704 = vmatpush1.msra.mxu0 0.0
        %1705 = vmatprep.subr.mxu0 0.0
        %1706 = vmatpush1.msra.mxu0 0.0
        %1707 = vmatprep.subr.mxu0 0.0
        %1708 = vmatpush1.msra.mxu0 0.0
        %1709 = vmatprep.subr.mxu0 0.0
        %1710 = vmatpush1.msra.mxu0 0.0
        %1711 = vmatprep.subr.mxu0 0.0
        %1712 = vmatpush1.msra.mxu0 0.0
        %1713 = vmatprep.subr.mxu0 0.0
        %1714 = vmatpush1.msra.mxu0 0.0
        %1715 = vmatprep.subr.mxu0 0.0
        %1716 = vmatpush1.msra.mxu0 0.0
        %1717 = vmatprep.subr.mxu0 0.0
        %1718 = vmatpush1.msra.mxu0 0.0
        %1719 = vmatprep.subr.mxu0 0.0
        %1720 = vmatpush1.msra.mxu0 0.0
        %1721 = vmatprep.subr.mxu0 0.0
        %1722 = vmatpush1.msra.mxu0 0.0
        %1723 = vmatprep.subr.mxu0 0.0
        %1724 = vmatpush1.msra.mxu0 0.0
        %1725 = vmatprep.subr.mxu0 0.0
        %1726 = vmatpush1.msra.mxu0 0.0
        %1727 = vmatprep.subr.mxu0 0.0
        %1728 = vmatpush1.msra.mxu0 0.0
        %1729 = vmatprep.subr.mxu0 0.0
        %1730 = vmatpush1.msra.mxu0 0.0
        %1731 = vmatprep.subr.mxu0 0.0
        %1732 = vmatpush1.msra.mxu0 0.0
        %1733 = vmatprep.subr.mxu0 0.0
        %1734 = vmatpush1.msra.mxu0 0.0
        %1735 = vmatprep.subr.mxu0 0.0
        %1736 = vmatpush1.msra.mxu0 0.0
        %1737 = vmatprep.subr.mxu0 0.0
        %1738 = vmatpush1.msra.mxu0 0.0
        %1739 = vmatprep.subr.mxu0 0.0
        %1740 = vmatpush1.msra.mxu0 0.0
        %1741 = vmatprep.subr.mxu0 0.0
        %1742 = vmatpush1.msra.mxu0 0.0
        %1743 = vmatprep.subr.mxu0 0.0
        %1744 = vmatpush1.msra.mxu0 0.0
        %1745 = vmatprep.subr.mxu0 0.0
        %1746 = vmatpush1.msra.mxu0 0.0
        %1747 = vmatprep.subr.mxu0 0.0
        %1748 = vmatpush1.msra.mxu0 0.0
        %1749 = vmatprep.subr.mxu0 0.0
        %1750 = vmatpush1.msra.mxu0 0.0
        %1751 = vmatprep.subr.mxu0 0.0
        %1752 = vmatpush1.msra.mxu0 0.0
        %1753 = vmatprep.subr.mxu0 0.0
        %1754 = vmatpush1.msra.mxu0 0.0
        %1755 = vmatprep.subr.mxu0 0.0
        %1756 = vmatpush1.msra.mxu0 0.0
        %1757 = vmatprep.subr.mxu0 0.0
        %1758 = vmatpush1.msra.mxu0 0.0
        %1759 = vmatprep.subr.mxu0 0.0
        %1760 = vmatpush1.msra.mxu0 0.0
        %1761 = vmatprep.mubr.f32.mxu0 0.0
        %v1762 = vand.u32 %v1392, 4294901760
        %1763 = vmatmul.mubr.f32.gmra.mrb[0].mxu0 %v1762
        %v1764 = vpop.f32.mrb[0].mxu0
        %v1765 = vadd.f32 %v1691, %v1764
        %v1766 = vpop.f32.mrb[0].mxu0
        %1767 = vdwg.mxu0
        %1768 = vmatprep.subr.mxu0 0.0
        %v1769 = vand.u32 %v1347, 4294901760
        %1770 = vmatpush1.msra.mxu0 %v1769
        %1771 = vmatprep.subr.mxu0 0.0
        %1772 = vmatpush1.msra.mxu0 0.0
        %1773 = vmatprep.subr.mxu0 0.0
        %1774 = vmatpush1.msra.mxu0 0.0
        %1775 = vmatprep.subr.mxu0 0.0
        %1776 = vmatpush1.msra.mxu0 0.0
        %1777 = vmatprep.subr.mxu0 0.0
        %1778 = vmatpush1.msra.mxu0 0.0
        %1779 = vmatprep.subr.mxu0 0.0
        %1780 = vmatpush1.msra.mxu0 0.0
        %1781 = vmatprep.subr.mxu0 0.0
        %1782 = vmatpush1.msra.mxu0 0.0
        %1783 = vmatprep.subr.mxu0 0.0
        %1784 = vmatpush1.msra.mxu0 0.0
        %1785 = vmatprep.subr.mxu0 0.0
        %1786 = vmatpush1.msra.mxu0 0.0
        %1787 = vmatprep.subr.mxu0 0.0
        %1788 = vmatpush1.msra.mxu0 0.0
        %1789 = vmatprep.subr.mxu0 0.0
        %1790 = vmatpush1.msra.mxu0 0.0
        %1791 = vmatprep.subr.mxu0 0.0
        %1792 = vmatpush1.msra.mxu0 0.0
        %1793 = vmatprep.subr.mxu0 0.0
        %1794 = vmatpush1.msra.mxu0 0.0
        %1795 = vmatprep.subr.mxu0 0.0
        %1796 = vmatpush1.msra.mxu0 0.0
        %1797 = vmatprep.subr.mxu0 0.0
        %1798 = vmatpush1.msra.mxu0 0.0
        %1799 = vmatprep.subr.mxu0 0.0
        %1800 = vmatpush1.msra.mxu0 0.0
        %1801 = vmatprep.subr.mxu0 0.0
        %1802 = vmatpush1.msra.mxu0 0.0
        %1803 = vmatprep.subr.mxu0 0.0
        %1804 = vmatpush1.msra.mxu0 0.0
        %1805 = vmatprep.subr.mxu0 0.0
        %1806 = vmatpush1.msra.mxu0 0.0
        %1807 = vmatprep.subr.mxu0 0.0
        %1808 = vmatpush1.msra.mxu0 0.0
        %1809 = vmatprep.subr.mxu0 0.0
        %1810 = vmatpush1.msra.mxu0 0.0
        %1811 = vmatprep.subr.mxu0 0.0
        %1812 = vmatpush1.msra.mxu0 0.0
        %1813 = vmatprep.subr.mxu0 0.0
        %1814 = vmatpush1.msra.mxu0 0.0
        %1815 = vmatprep.subr.mxu0 0.0
        %1816 = vmatpush1.msra.mxu0 0.0
        %1817 = vmatprep.subr.mxu0 0.0
        %1818 = vmatpush1.msra.mxu0 0.0
        %1819 = vmatprep.subr.mxu0 0.0
        %1820 = vmatpush1.msra.mxu0 0.0
        %1821 = vmatprep.subr.mxu0 0.0
        %1822 = vmatpush1.msra.mxu0 0.0
        %1823 = vmatprep.subr.mxu0 0.0
        %1824 = vmatpush1.msra.mxu0 0.0
        %1825 = vmatprep.subr.mxu0 0.0
        %1826 = vmatpush1.msra.mxu0 0.0
        %1827 = vmatprep.subr.mxu0 0.0
        %1828 = vmatpush1.msra.mxu0 0.0
        %1829 = vmatprep.subr.mxu0 0.0
        %1830 = vmatpush1.msra.mxu0 0.0
        %1831 = vmatprep.subr.mxu0 0.0
        %1832 = vmatpush1.msra.mxu0 0.0
        %1833 = vmatprep.mubr.f32.mxu0 0.0
        %v1834 = vand.u32 %v1392, 4294901760
        %1835 = vmatmul.mubr.f32.gmra.mrb[0].mxu0 %v1834
        %v1836 = vpop.f32.mrb[0].mxu0
        %v1837 = vadd.f32 %v1765, %v1836
        %v1838 = vpop.f32.mrb[0].mxu0
        %1839 = vdwg.mxu0
        %v1840 = vadd.f32 %v1389, %v1837
        %vm1841 = vcmask 253952
        %1842 = vst.msk [vmem:[#allocation4] sm:$0x1] %vm1841, %v1840
        %1843 = vst.msk [vmem:[#allocation2] sm:$0x1] %vm1377, %v1355
        %1844 = vst.msk [vmem:[%s363] sm:$0x1] %vm1351, %v851
        // Predicated region
        $region53: #{tpu_custom_call.1} parent=39 // pred_check
          %p1845 = pneg %p380
        $region54: #{tpu_custom_call.1} parent=39 // pred_check_branch
          %1847 = sbr.rel (%p1845) target = $region56
        $region55: #{tpu_custom_call.1} parent=39 // pred_region
          %v1848 = vld [vmem:[#allocation2] sm:$0x1]
          %1849 = vst.msk [vmem:[%s376] sm:$0x1] %vm1377, %v1848
          %v1850 = vld [vmem:[#allocation3] sm:$0x1]
          %1851 = vst.msk [vmem:[%s379] sm:$0x1] %vm1377, %v1850
          %v1852 = vld [vmem:[#allocation4] sm:$0x1]
          %v1853 = vld [vmem:[#allocation3] sm:$0x1]
          %v1854 = vrcp.pop %v1853
          %v1855 = vmul.f32 1.0, %v1854
          %1857 = vset.pattern.permute.xlu0 0
          %1858 = vperm.xlu0 %1857, %v1855
          %v1859 = vpop.permute.xlu0 %1858
          %v1861 = vlaneseq
          %v1862 = vshrl.u32 %v1861, 7
          %v1863 = vsub.s32 0, %v1862
          %v1864 = vrot.slane %v1859, %v1863
          %v1865 = vmul.f32 %v1852, %v1864
          %1866 = vst.msk [vmem:[%s357] sm:$0x1] %vm1841, %v1865
        $region56: #{tpu_custom_call.1} parent=39 // pred_fallthru
          _
        %s1867 = sand.u32 %s164, 1
        %s1868 = scalar_lea.sflag [#allocation8], %s1867
        %s1869 = sand.u32 %s164, 1
        %s1870 = scalar_lea.vmem [#allocation11], %s1869
        %s1871 = sand.u32 %s192, 1
        %s1872 = scalar_lea.sflag [#allocation13], %s1871
        %s1873 = sand.u32 %s192, 1
        %s1874 = scalar_lea.vmem [#allocation12], %s1873
        %p1875 = scmp.lt.s32.totalorder %s36, 1
        %s1876 = scalar_select %p1875, %s36, 1
        %s1877 = scalar_lea.vmem %s7, %s1876
        %p1878 = scmp.lt.s32.totalorder %s36, 1
        %s1879 = scalar_select %p1878, %s36, 1
        %s1880 = scalar_lea.vmem %s8, %s1879
        // Predicated region
        $region57: #{tpu_custom_call.1} parent=39 // pred_check
          %p1881 = pneg %p174
        $region58: #{tpu_custom_call.1} parent=39 // pred_check_branch
          %1883 = sbr.rel (%p1881) target = $region60
        $region59: #{tpu_custom_call.1} parent=39 // pred_region
          %s1885 = ssub.s32 16, 16
          %1886 = vsyncadd %s1868, %s1885
          %s1887 = smul.addr %s36, 16
          %s1888 = scalar_lea.hbm %s5, %s1887
          %s1890 = sshll.u32 %s1870, 4
          %s1891 = int_to_ptr.vmem [resolvable:$true] %s1890
          %1893 = dma.vmem_to_hbm [thread:$0]  %s1891, 16, %s1888, %s1868
        $region60: #{tpu_custom_call.1} parent=39 // pred_fallthru
          _
        // Predicated region
        $region61: #{tpu_custom_call.1} parent=39 // pred_check
          %p1894 = pneg %p202
        $region62: #{tpu_custom_call.1} parent=39 // pred_check_branch
          %1896 = sbr.rel (%p1894) target = $region64
        $region63: #{tpu_custom_call.1} parent=39 // pred_region
          %s1898 = ssub.s32 16, 16
          %1899 = vsyncadd %s1872, %s1898
          %s1900 = sadd.s32 %s37, %s36
          %s1901 = smul.addr %s1900, 16
          %s1902 = scalar_lea.hbm %s6, %s1901
          %s1904 = sshll.u32 %s1874, 4
          %s1905 = int_to_ptr.vmem [resolvable:$true] %s1904
          %1907 = dma.vmem_to_hbm [thread:$0]  %s1905, 16, %s1902, %s1872
        $region64: #{tpu_custom_call.1} parent=39 // pred_fallthru
          _
        // Predicated region
        $region65: #{tpu_custom_call.1} parent=39 // pred_check
          %p1908 = pneg %p228
        $region66: #{tpu_custom_call.1} parent=39 // pred_check_branch
          %1910 = sbr.rel (%p1908) target = $region68
        $region67: #{tpu_custom_call.1} parent=39 // pred_region
          _
        $region68: #{tpu_custom_call.1} parent=39 // pred_fallthru
          _
        // Predicated region
        $region69: #{tpu_custom_call.1} parent=39 // pred_check
          %p1911 = pneg %p254
        $region70: #{tpu_custom_call.1} parent=39 // pred_check_branch
          %1913 = sbr.rel (%p1911) target = $region72
        $region71: #{tpu_custom_call.1} parent=39 // pred_region
          _
        $region72: #{tpu_custom_call.1} parent=39 // pred_fallthru
          _
      $region40: #{tpu_custom_call.1} parent=5 // pred_fallthru
        _
      %p1914 = scmp.le.s32.totalorder 2, %s27
      // Predicated region
      $region73: #{tpu_custom_call.1} parent=5 // pred_check
        %p1915 = pneg %p1914
      $region74: #{tpu_custom_call.1} parent=5 // pred_check_branch
        %1917 = sbr.rel (%p1915) target = $region76
      $region75: #{tpu_custom_call.1} parent=5 // pred_region
        %s1918 = ssub.s32 %s27, 2
        // Predicated region
        $region77: #{tpu_custom_call.1} parent=75 // pred_check
          %p1919 = pneg %p180
        $region78: #{tpu_custom_call.1} parent=75 // pred_check_branch
          %1921 = sbr.rel (%p1919) target = $region80
        $region79: #{tpu_custom_call.1} parent=75 // pred_region
          %s1922 = sand.u32 %s165, 1
          %s1923 = scalar_lea.sflag [#allocation8], %s1922
          %s1924 = sand.u32 %s165, 1
          %s1925 = scalar_lea.vmem [#allocation11], %s1924
          %1926 = dma.done %s1923, 16
        $region80: #{tpu_custom_call.1} parent=75 // pred_fallthru
          _
        // Predicated region
        $region81: #{tpu_custom_call.1} parent=75 // pred_check
          %p1927 = pneg %p208
        $region82: #{tpu_custom_call.1} parent=75 // pred_check_branch
          %1929 = sbr.rel (%p1927) target = $region84
        $region83: #{tpu_custom_call.1} parent=75 // pred_region
          %s1930 = sand.u32 %s193, 1
          %s1931 = scalar_lea.sflag [#allocation13], %s1930
          %s1932 = sand.u32 %s193, 1
          %s1933 = scalar_lea.vmem [#allocation12], %s1932
          %1934 = dma.done %s1931, 16
        $region84: #{tpu_custom_call.1} parent=75 // pred_fallthru
          _
        // Predicated region
        $region85: #{tpu_custom_call.1} parent=75 // pred_check
          %p1935 = pneg %p234
        $region86: #{tpu_custom_call.1} parent=75 // pred_check_branch
          %1937 = sbr.rel (%p1935) target = $region88
        $region87: #{tpu_custom_call.1} parent=75 // pred_region
          %p1938 = scmp.lt.s32.totalorder %s38, 1
          %s1939 = scalar_select %p1938, %s38, 1
          %s1940 = scalar_lea.vmem %s7, %s1939
        $region88: #{tpu_custom_call.1} parent=75 // pred_fallthru
          _
        // Predicated region
        $region89: #{tpu_custom_call.1} parent=75 // pred_check
          %p1941 = pneg %p260
        $region90: #{tpu_custom_call.1} parent=75 // pred_check_branch
          %1943 = sbr.rel (%p1941) target = $region92
        $region91: #{tpu_custom_call.1} parent=75 // pred_region
          %p1944 = scmp.lt.s32.totalorder %s38, 1
          %s1945 = scalar_select %p1944, %s38, 1
          %s1946 = scalar_lea.vmem %s8, %s1945
        $region92: #{tpu_custom_call.1} parent=75 // pred_fallthru
          _
      $region76: #{tpu_custom_call.1} parent=5 // pred_fallthru
        _
    $region6: #{tpu_custom_call.1} parent=1 // loop_footer
      %s31 = sadd.s32 1, %s27
    $region7: #{tpu_custom_call.1} parent=1 // loop_footer_branch
      %26 = sbr.rel target = $region3
    $region8: #{tpu_custom_call.1} parent=1 // loop_exit
      _
    %1947 = vsyncpa [#allocation7], 1
    %s1948 = scalar_lea.sflag [#allocation7], 1
    %1949 = vsyncpa %s1948, 1
    %1950 = vsyncpa [#allocation10], 1
    %1951 = vsyncpa [#allocation8], 1
    %s1952 = scalar_lea.sflag [#allocation8], 1
    %1953 = vsyncpa %s1952, 1
    %1954 = vsyncpa [#allocation13], 1
    %s1955 = scalar_lea.sflag [#allocation13], 1
    %1956 = vsyncpa %s1955, 1

</llo_original>
